<compile_context>
chip_gen: v6e
topology: v6e:2x2x1
jax: 0.10.0
libtpu: 0.0.40
codegen_flags: <defaults>
</compile_context>

<pallas_src>
import jax
import jax.numpy as jnp
from jax.experimental import pallas as pl
from jax.experimental.pallas import tpu as pltpu


def _upconv_kernel(x_ref, w_ref, b_ref, o_ref, col_ref):
    """One batch element per grid step.

    x_ref  : (1, H, W, Cin)        compute dtype (bf16)
    w_ref  : (5, 3*Cin, 2*Cout)    compute dtype; rows [0:3] = even output rows
                                   (kernel rows 0,2,4), [3:5] = odd output rows
                                   (kernel rows 1,3); BN scale already folded in.
    b_ref  : (1, 2*Cout)           f32 folded BN bias, tiled [bias, bias]
    o_ref  : (1, H, 2, W, 2*Cout)  f32; [:, :, 0] = even output rows, [:, :, 1] = odd
    col_ref: (H+2, W, 3*Cin)       scratch; column taps (q-1, q, q+1) packed on lanes
    """
    _, H, W, Cin = x_ref.shape
    K3 = col_ref.shape[-1]            # 3 * Cin
    C2 = o_ref.shape[-1]              # 2 * Cout
    dt = col_ref.dtype

    # ---- build the dx-im2col buffer -----------------------------------------
    # Re-zero only the halo (top/bottom rows + the two invalid column strips);
    # the interior is fully overwritten below every step.
    col_ref[0:1] = jnp.zeros((1, W, K3), dt)
    col_ref[H + 1:H + 2] = jnp.zeros((1, W, K3), dt)
    col_ref[1:H + 1, 0:1, 0:Cin] = jnp.zeros((H, 1, Cin), dt)
    col_ref[1:H + 1, W - 1:W, 2 * Cin:K3] = jnp.zeros((H, 1, Cin), dt)

    x = x_ref[0]                                           # (H, W, Cin)
    col_ref[1:H + 1, 1:W, 0:Cin] = x[:, 0:W - 1, :]         # tap q-1
    col_ref[1:H + 1, :, Cin:2 * Cin] = x                    # tap q
    col_ref[1:H + 1, 0:W - 1, 2 * Cin:K3] = x[:, 1:W, :]    # tap q+1

    def window(a):
        # rows a .. a+H-1 of the buffer == input-row offset (a - 1); pure view.
        return col_ref[a:a + H].reshape(H * W, K3)

    bias = b_ref[...]                                      # (1, 2*Cout) f32

    # even output rows: input-row offsets -1, 0, +1  (kernel rows 0, 2, 4)
    even = jnp.dot(window(0), w_ref[0], preferred_element_type=jnp.float32)
    even = even + jnp.dot(window(1), w_ref[1], preferred_element_type=jnp.float32)
    even = even + jnp.dot(window(2), w_ref[2], preferred_element_type=jnp.float32)
    even = jnp.maximum(even + bias, 0.0)
    o_ref[0:1, :, 0:1] = even.reshape(1, H, 1, W, C2)

    # odd output rows: input-row offsets 0, +1  (kernel rows 1, 3)
    odd = jnp.dot(window(1), w_ref[3], preferred_element_type=jnp.float32)
    odd = odd + jnp.dot(window(2), w_ref[4], preferred_element_type=jnp.float32)
    odd = jnp.maximum(odd + bias, 0.0)
    o_ref[0:1, :, 1:2] = odd.reshape(1, H, 1, W, C2)


def upconv_nhwc(x_nhwc, w_all, bias2, *, compute_dtype=jnp.bfloat16):
    """x_nhwc: (N, H, W, Cin).  Returns NHWC output (N, 2H, 2W, Cout), f32."""
    N, H, W, Cin = x_nhwc.shape
    K3 = 3 * Cin
    C2 = w_all.shape[-1]
    Cout = C2 // 2
    assert w_all.shape == (5, K3, C2)

    out5 = pl.pallas_call(
        _upconv_kernel,
        out_shape=jax.ShapeDtypeStruct((N, H, 2, W, C2), jnp.float32),
        grid_spec=pltpu.PrefetchScalarGridSpec(
            num_scalar_prefetch=0,
            grid=(N,),                      # batch-parallel; N>=2 keeps both v7x TCs busy
            in_specs=[
                pl.BlockSpec((1, H, W, Cin), lambda b: (b, 0, 0, 0)),
                pl.BlockSpec((5, K3, C2), lambda b: (0, 0, 0)),
                pl.BlockSpec((1, C2), lambda b: (0, 0)),
            ],
            out_specs=pl.BlockSpec((1, H, 2, W, C2), lambda b: (b, 0, 0, 0, 0)),
            scratch_shapes=[pltpu.VMEM((H + 2, W, K3), compute_dtype)],
        ),
        compiler_params=pltpu.CompilerParams(
            dimension_semantics=("parallel",),
            vmem_limit_bytes=64 * 1024 * 1024,
        ),
    )(x_nhwc.astype(compute_dtype), w_all.astype(compute_dtype),
      bias2.astype(jnp.float32))

    # (N, H, 2, W, 2*Cout) -> (N, 2H, 2W, Cout): pure row-major reshape (free).
    return out5.reshape(N, 2 * H, 2 * W, Cout)


def upconv_nchw(x_nchw, w_all, bias2, **kw):
    """NCHW in/out for PyTorch parity.  (Prefer upconv_nhwc in a real model to
    avoid the two wrapper transposes / extra HBM passes.)"""
    x_nhwc = jnp.transpose(x_nchw, (0, 2, 3, 1))
    out = upconv_nhwc(x_nhwc, w_all, bias2, **kw)
    return jnp.transpose(out, (0, 3, 1, 2))


# ------------------------ host-side parameter prep ------------------------
def fold_bn(gamma, beta, mean, var, eps=1e-5):
    scale = gamma / jnp.sqrt(var + eps)
    bias = beta - mean * scale
    return scale, bias


def prepare_weights(w_conv, bn_scale, bn_bias):
    """w_conv: PyTorch layout (Cout, Cin, 5, 5).

    Returns:
      w_all : (5, 3*Cin, 2*Cout) parity-decomposed weights, BN scale folded in.
              Leading axis: even output rows with kernel rows (0,2,4), then odd
              output rows with kernel rows (1,3).  Along K: the 3 Cin blocks are
              the column taps (q-1, q, q+1).  Along N: first Cout columns produce
              even output columns, last Cout the odd ones.
      bias2 : (1, 2*Cout) folded BN bias, tiled for the packed even/odd columns.
    """
    Cout, Cin, KH, KW = w_conv.shape
    assert (KH, KW) == (5, 5)
    w = w_conv * bn_scale[:, None, None, None]        # fold BN scale into the conv
    w = jnp.transpose(w, (2, 3, 1, 0))                # (5, 5, Cin, Cout)
    zero = jnp.zeros((Cin, Cout), w.dtype)

    def per_row(ky):
        even_cols = jnp.concatenate([w[ky, 0], w[ky, 2], w[ky, 4]], axis=0)  # (3Cin, Cout)
        odd_cols = jnp.concatenate([zero, w[ky, 1], w[ky, 3]], axis=0)       # (3Cin, Cout)
        return jnp.concatenate([even_cols, odd_cols], axis=1)                # (3Cin, 2Cout)

    w_all = jnp.stack([per_row(0), per_row(2), per_row(4), per_row(1), per_row(3)])
    bias2 = jnp.concatenate([bn_bias, bn_bias])[None, :]
    return w_all, bias2


# --------------------------- pure-JAX reference ---------------------------
def upconv_ref(x_nchw, w_conv, bn_scale, bn_bias, compute_dtype=jnp.bfloat16):
    """Literal Unpool (zero insertion x2) -> 5x5 conv (pad 2) -> BN(eval) -> ReLU.
    Matmul operands in compute_dtype, f32 accumulation (matches the kernel)."""
    N, C, H, W = x_nchw.shape
    up = jnp.zeros((N, C, 2 * H, 2 * W), x_nchw.dtype).at[:, :, ::2, ::2].set(x_nchw)
    w = (w_conv * bn_scale[:, None, None, None]).astype(compute_dtype)
    y = jax.lax.conv_general_dilated(
        up.astype(compute_dtype), w,
        window_strides=(1, 1), padding=((2, 2), (2, 2)),
        dimension_numbers=("NCHW", "OIHW", "NCHW"),
        preferred_element_type=jnp.float32)
    y = y + bn_bias[None, :, None, None]
    return jnp.maximum(y, 0.0)


if __name__ == "__main__":
    key = jax.random.PRNGKey(0)
    # Demo-small shapes (lane/MXU-starved by design); realistic decoder widths
    # (Cin/Cout >= 64..256) fill the 128-lane tiles and the 256-wide MXU.
    N, Cin, Cout, H, W = 2, 8, 16, 16, 16
    ks = jax.random.split(key, 6)

    # PyTorch-layout parameters: conv1.weight (Cout, Cin, 5, 5) + bn1 params.
    w_conv = jax.random.normal(ks[0], (Cout, Cin, 5, 5), jnp.float32) * 0.2
    gamma = 0.5 + jax.random.uniform(ks[1], (Cout,), jnp.float32)
    beta = jax.random.normal(ks[2], (Cout,), jnp.float32) * 0.1
    mean = jax.random.normal(ks[3], (Cout,), jnp.float32) * 0.1
    var = 0.5 + jax.random.uniform(ks[4], (Cout,), jnp.float32)
    x = jax.random.normal(ks[5], (N, Cin, H, W), jnp.float32)

    bn_scale, bn_bias = fold_bn(gamma, beta, mean, var)
    w_all, bias2 = prepare_weights(w_conv, bn_scale, bn_bias)

    out = upconv_nchw(x, w_all, bias2)
    out = jax.block_until_ready(out)
    assert out.shape == (N, Cout, 2 * H, 2 * W)

    ref = upconv_ref(x, w_conv, bn_scale, bn_bias)
    assert jnp.allclose(out, ref, rtol=1e-3, atol=1e-3), "mismatch vs reference"

    print("KERNEL_OK")
</pallas_src>

<mosaic_0001>
module attributes {stable_mosaic.version = 11 : i64} {
  func.func @_upconv_kernel(%arg0: i32, %arg1: memref<1x16x16x8xbf16, #tpu.memory_space<vmem>>, %arg2: memref<5x24x32xbf16, #tpu.memory_space<vmem>>, %arg3: memref<1x32xf32, #tpu.memory_space<vmem>>, %arg4: memref<1x16x2x16x32xf32, #tpu.memory_space<vmem>>, %arg5: memref<18x16x24xbf16, #tpu.memory_space<vmem>>) attributes {dimension_semantics = [#tpu.dimension_semantics<parallel>], iteration_bounds = array<i64: 2>, scalar_prefetch = 0 : i64, scratch_operands = 1 : i64, tpu.core_type = #tpu.core_type<tc>, window_params = [{transform_indices = @transform_0, window_bounds = array<i64: 1, 16, 16, 8>}, {pipeline_mode = #tpu.pipeline_mode<synchronous>, transform_indices = @transform_1, window_bounds = array<i64: 5, 24, 32>}, {pipeline_mode = #tpu.pipeline_mode<synchronous>, transform_indices = @transform_2, window_bounds = array<i64: 1, 32>}, {transform_indices = @transform_3, window_bounds = array<i64: 1, 16, 2, 16, 32>}]} {
    %cst = arith.constant 0.000000e+00 : bf16
    %0 = vector.broadcast %cst : bf16 to vector<1x16x24xbf16>
    %c0 = arith.constant 0 : index
    %c0_0 = arith.constant 0 : index
    %c0_1 = arith.constant 0 : index
    %1 = vector.load %arg5[%c0, %c0_0, %c0_1] : memref<18x16x24xbf16, #tpu.memory_space<vmem>>, vector<1x16x24xbf16>
    tpu.vector_store %arg5[%c0, %c0_0, %c0_1], %0 {strides = array<i32>} : memref<18x16x24xbf16, #tpu.memory_space<vmem>>, vector<1x16x24xbf16>,
    %cst_2 = arith.constant 0.000000e+00 : bf16
    %2 = vector.broadcast %cst_2 : bf16 to vector<1x16x24xbf16>
    %c17 = arith.constant 17 : index
    %c0_3 = arith.constant 0 : index
    %c0_4 = arith.constant 0 : index
    %3 = vector.load %arg5[%c17, %c0_3, %c0_4] : memref<18x16x24xbf16, #tpu.memory_space<vmem>>, vector<1x16x24xbf16>
    tpu.vector_store %arg5[%c17, %c0_3, %c0_4], %2 {strides = array<i32>} : memref<18x16x24xbf16, #tpu.memory_space<vmem>>, vector<1x16x24xbf16>,
    %cst_5 = arith.constant 0.000000e+00 : bf16
    %4 = vector.broadcast %cst_5 : bf16 to vector<16x1x8xbf16>
    %c1 = arith.constant 1 : index
    %c0_6 = arith.constant 0 : index
    %c0_7 = arith.constant 0 : index
    %5 = vector.load %arg5[%c1, %c0_6, %c0_7] : memref<18x16x24xbf16, #tpu.memory_space<vmem>>, vector<16x1x8xbf16>
    tpu.vector_store %arg5[%c1, %c0_6, %c0_7], %4 {strides = array<i32>} : memref<18x16x24xbf16, #tpu.memory_space<vmem>>, vector<16x1x8xbf16>,
    %cst_8 = arith.constant 0.000000e+00 : bf16
    %6 = vector.broadcast %cst_8 : bf16 to vector<16x1x8xbf16>
    %c1_9 = arith.constant 1 : index
    %c15 = arith.constant 15 : index
    %c16 = arith.constant 16 : index
    %7 = vector.load %arg5[%c1_9, %c15, %c16] : memref<18x16x24xbf16, #tpu.memory_space<vmem>>, vector<16x1x8xbf16>
    tpu.vector_store %arg5[%c1_9, %c15, %c16], %6 {strides = array<i32>} : memref<18x16x24xbf16, #tpu.memory_space<vmem>>, vector<16x1x8xbf16>,
    %c0_10 = arith.constant 0 : index
    %c0_11 = arith.constant 0 : index
    %c0_12 = arith.constant 0 : index
    %c0_13 = arith.constant 0 : index
    %8 = vector.load %arg1[%c0_10, %c0_11, %c0_12, %c0_13] : memref<1x16x16x8xbf16, #tpu.memory_space<vmem>>, vector<1x16x16x8xbf16>
    %9 = vector.shape_cast %8 : vector<1x16x16x8xbf16> to vector<16x16x8xbf16>
    %10 = vector.extract_strided_slice %9 {offsets = [0, 0, 0], sizes = [16, 15, 8], strides = [1, 1, 1]} : vector<16x16x8xbf16> to vector<16x15x8xbf16>
    %c1_14 = arith.constant 1 : index
    %c1_15 = arith.constant 1 : index
    %c0_16 = arith.constant 0 : index
    %11 = vector.load %arg5[%c1_14, %c1_15, %c0_16] : memref<18x16x24xbf16, #tpu.memory_space<vmem>>, vector<16x15x8xbf16>
    tpu.vector_store %arg5[%c1_14, %c1_15, %c0_16], %10 {strides = array<i32>} : memref<18x16x24xbf16, #tpu.memory_space<vmem>>, vector<16x15x8xbf16>,
    %c1_17 = arith.constant 1 : index
    %c0_18 = arith.constant 0 : index
    %c8 = arith.constant 8 : index
    %12 = vector.load %arg5[%c1_17, %c0_18, %c8] : memref<18x16x24xbf16, #tpu.memory_space<vmem>>, vector<16x16x8xbf16>
    tpu.vector_store %arg5[%c1_17, %c0_18, %c8], %9 {strides = array<i32>} : memref<18x16x24xbf16, #tpu.memory_space<vmem>>, vector<16x16x8xbf16>,
    %13 = vector.extract_strided_slice %9 {offsets = [0, 1, 0], sizes = [16, 15, 8], strides = [1, 1, 1]} : vector<16x16x8xbf16> to vector<16x15x8xbf16>
    %c1_19 = arith.constant 1 : index
    %c0_20 = arith.constant 0 : index
    %c16_21 = arith.constant 16 : index
    %14 = vector.load %arg5[%c1_19, %c0_20, %c16_21] : memref<18x16x24xbf16, #tpu.memory_space<vmem>>, vector<16x15x8xbf16>
    tpu.vector_store %arg5[%c1_19, %c0_20, %c16_21], %13 {strides = array<i32>} : memref<18x16x24xbf16, #tpu.memory_space<vmem>>, vector<16x15x8xbf16>,
    %c0_22 = arith.constant 0 : index
    %c0_23 = arith.constant 0 : index
    %15 = vector.load %arg3[%c0_22, %c0_23] : memref<1x32xf32, #tpu.memory_space<vmem>>, vector<1x32xf32>
    %c0_24 = arith.constant 0 : index
    %c0_25 = arith.constant 0 : index
    %c0_26 = arith.constant 0 : index
    %16 = vector.load %arg5[%c0_24, %c0_25, %c0_26] : memref<18x16x24xbf16, #tpu.memory_space<vmem>>, vector<16x16x24xbf16>
    %17 = vector.shape_cast %16 : vector<16x16x24xbf16> to vector<256x24xbf16>
    %c0_27 = arith.constant 0 : index
    %c0_28 = arith.constant 0 : index
    %c0_29 = arith.constant 0 : index
    %18 = vector.load %arg2[%c0_27, %c0_28, %c0_29] : memref<5x24x32xbf16, #tpu.memory_space<vmem>>, vector<1x24x32xbf16>
    %19 = vector.shape_cast %18 : vector<1x24x32xbf16> to vector<24x32xbf16>
    %cst_30 = arith.constant dense<0.000000e+00> : vector<256x32xf32>
    %20 = tpu.matmul %17, %19, %cst_30 {dimension_numbers = #tpu.dot_dimension_numbers<[1], [0], [0], [1], [0, 0, 1, 1], [], []>} : vector<256x24xbf16>, vector<24x32xbf16>, vector<256x32xf32> -> vector<256x32xf32>
    %c1_31 = arith.constant 1 : index
    %c0_32 = arith.constant 0 : index
    %c0_33 = arith.constant 0 : index
    %21 = vector.load %arg5[%c1_31, %c0_32, %c0_33] : memref<18x16x24xbf16, #tpu.memory_space<vmem>>, vector<16x16x24xbf16>
    %22 = vector.shape_cast %21 : vector<16x16x24xbf16> to vector<256x24xbf16>
    %c1_34 = arith.constant 1 : index
    %c0_35 = arith.constant 0 : index
    %c0_36 = arith.constant 0 : index
    %23 = vector.load %arg2[%c1_34, %c0_35, %c0_36] : memref<5x24x32xbf16, #tpu.memory_space<vmem>>, vector<1x24x32xbf16>
    %24 = vector.shape_cast %23 : vector<1x24x32xbf16> to vector<24x32xbf16>
    %cst_37 = arith.constant dense<0.000000e+00> : vector<256x32xf32>
    %25 = tpu.matmul %22, %24, %cst_37 {dimension_numbers = #tpu.dot_dimension_numbers<[1], [0], [0], [1], [0, 0, 1, 1], [], []>} : vector<256x24xbf16>, vector<24x32xbf16>, vector<256x32xf32> -> vector<256x32xf32>
    %26 = arith.addf %20, %25 : vector<256x32xf32>
    %c2 = arith.constant 2 : index
    %c0_38 = arith.constant 0 : index
    %c0_39 = arith.constant 0 : index
    %27 = vector.load %arg5[%c2, %c0_38, %c0_39] : memref<18x16x24xbf16, #tpu.memory_space<vmem>>, vector<16x16x24xbf16>
    %28 = vector.shape_cast %27 : vector<16x16x24xbf16> to vector<256x24xbf16>
    %c2_40 = arith.constant 2 : index
    %c0_41 = arith.constant 0 : index
    %c0_42 = arith.constant 0 : index
    %29 = vector.load %arg2[%c2_40, %c0_41, %c0_42] : memref<5x24x32xbf16, #tpu.memory_space<vmem>>, vector<1x24x32xbf16>
    %30 = vector.shape_cast %29 : vector<1x24x32xbf16> to vector<24x32xbf16>
    %cst_43 = arith.constant dense<0.000000e+00> : vector<256x32xf32>
    %31 = tpu.matmul %28, %30, %cst_43 {dimension_numbers = #tpu.dot_dimension_numbers<[1], [0], [0], [1], [0, 0, 1, 1], [], []>} : vector<256x24xbf16>, vector<24x32xbf16>, vector<256x32xf32> -> vector<256x32xf32>
    %32 = arith.addf %26, %31 : vector<256x32xf32>
    %33 = vector.broadcast %15 : vector<1x32xf32> to vector<256x32xf32>
    %34 = arith.addf %32, %33 : vector<256x32xf32>
    %cst_44 = arith.constant 0.000000e+00 : f32
    %35 = vector.broadcast %cst_44 : f32 to vector<256x32xf32>
    %36 = arith.maximumf %34, %35 : vector<256x32xf32>
    %37 = vector.shape_cast %36 : vector<256x32xf32> to vector<1x16x1x16x32xf32>
    %c0_45 = arith.constant 0 : index
    %c0_46 = arith.constant 0 : index
    %c0_47 = arith.constant 0 : index
    %c0_48 = arith.constant 0 : index
    %c0_49 = arith.constant 0 : index
    %38 = vector.load %arg4[%c0_45, %c0_46, %c0_47, %c0_48, %c0_49] : memref<1x16x2x16x32xf32, #tpu.memory_space<vmem>>, vector<1x16x1x16x32xf32>
    tpu.vector_store %arg4[%c0_45, %c0_46, %c0_47, %c0_48, %c0_49], %37 {strides = array<i32>} : memref<1x16x2x16x32xf32, #tpu.memory_space<vmem>>, vector<1x16x1x16x32xf32>,
    %c1_50 = arith.constant 1 : index
    %c0_51 = arith.constant 0 : index
    %c0_52 = arith.constant 0 : index
    %39 = vector.load %arg5[%c1_50, %c0_51, %c0_52] : memref<18x16x24xbf16, #tpu.memory_space<vmem>>, vector<16x16x24xbf16>
    %40 = vector.shape_cast %39 : vector<16x16x24xbf16> to vector<256x24xbf16>
    %c3 = arith.constant 3 : index
    %c0_53 = arith.constant 0 : index
    %c0_54 = arith.constant 0 : index
    %41 = vector.load %arg2[%c3, %c0_53, %c0_54] : memref<5x24x32xbf16, #tpu.memory_space<vmem>>, vector<1x24x32xbf16>
    %42 = vector.shape_cast %41 : vector<1x24x32xbf16> to vector<24x32xbf16>
    %cst_55 = arith.constant dense<0.000000e+00> : vector<256x32xf32>
    %43 = tpu.matmul %40, %42, %cst_55 {dimension_numbers = #tpu.dot_dimension_numbers<[1], [0], [0], [1], [0, 0, 1, 1], [], []>} : vector<256x24xbf16>, vector<24x32xbf16>, vector<256x32xf32> -> vector<256x32xf32>
    %c2_56 = arith.constant 2 : index
    %c0_57 = arith.constant 0 : index
    %c0_58 = arith.constant 0 : index
    %44 = vector.load %arg5[%c2_56, %c0_57, %c0_58] : memref<18x16x24xbf16, #tpu.memory_space<vmem>>, vector<16x16x24xbf16>
    %45 = vector.shape_cast %44 : vector<16x16x24xbf16> to vector<256x24xbf16>
    %c4 = arith.constant 4 : index
    %c0_59 = arith.constant 0 : index
    %c0_60 = arith.constant 0 : index
    %46 = vector.load %arg2[%c4, %c0_59, %c0_60] : memref<5x24x32xbf16, #tpu.memory_space<vmem>>, vector<1x24x32xbf16>
    %47 = vector.shape_cast %46 : vector<1x24x32xbf16> to vector<24x32xbf16>
    %cst_61 = arith.constant dense<0.000000e+00> : vector<256x32xf32>
    %48 = tpu.matmul %45, %47, %cst_61 {dimension_numbers = #tpu.dot_dimension_numbers<[1], [0], [0], [1], [0, 0, 1, 1], [], []>} : vector<256x24xbf16>, vector<24x32xbf16>, vector<256x32xf32> -> vector<256x32xf32>
    %49 = arith.addf %43, %48 : vector<256x32xf32>
    %50 = vector.broadcast %15 : vector<1x32xf32> to vector<256x32xf32>
    %51 = arith.addf %49, %50 : vector<256x32xf32>
    %cst_62 = arith.constant 0.000000e+00 : f32
    %52 = vector.broadcast %cst_62 : f32 to vector<256x32xf32>
    %53 = arith.maximumf %51, %52 : vector<256x32xf32>
    %54 = vector.shape_cast %53 : vector<256x32xf32> to vector<1x16x1x16x32xf32>
    %c0_63 = arith.constant 0 : index
    %c0_64 = arith.constant 0 : index
    %c1_65 = arith.constant 1 : index
    %c0_66 = arith.constant 0 : index
    %c0_67 = arith.constant 0 : index
    %55 = vector.load %arg4[%c0_63, %c0_64, %c1_65, %c0_66, %c0_67] : memref<1x16x2x16x32xf32, #tpu.memory_space<vmem>>, vector<1x16x1x16x32xf32>
    tpu.vector_store %arg4[%c0_63, %c0_64, %c1_65, %c0_66, %c0_67], %54 {strides = array<i32>} : memref<1x16x2x16x32xf32, #tpu.memory_space<vmem>>, vector<1x16x1x16x32xf32>,
    return
  }
  func.func @transform_0(%arg0: i32) -> (i32, i32, i32, i32) {
    %c0_i32 = arith.constant 0 : i32
    %c0_i32_0 = arith.constant 0 : i32
    %c0_i32_1 = arith.constant 0 : i32
    %c0_i32_2 = arith.constant 0 : i32
    return %arg0, %c0_i32, %c0_i32_0, %c0_i32_1 : i32, i32, i32, i32
  }
  func.func @transform_1(%arg0: i32) -> (i32, i32, i32) {
    %c0_i32 = arith.constant 0 : i32
    %c0_i32_0 = arith.constant 0 : i32
    %c0_i32_1 = arith.constant 0 : i32
    %c0_i32_2 = arith.constant 0 : i32
    return %c0_i32, %c0_i32_0, %c0_i32_1 : i32, i32, i32
  }
  func.func @transform_2(%arg0: i32) -> (i32, i32) {
    %c0_i32 = arith.constant 0 : i32
    %c0_i32_0 = arith.constant 0 : i32
    %c0_i32_1 = arith.constant 0 : i32
    return %c0_i32, %c0_i32_0 : i32, i32
  }
  func.func @transform_3(%arg0: i32) -> (i32, i32, i32, i32, i32) {
    %c0_i32 = arith.constant 0 : i32
    %c0_i32_0 = arith.constant 0 : i32
    %c0_i32_1 = arith.constant 0 : i32
    %c0_i32_2 = arith.constant 0 : i32
    %c0_i32_3 = arith.constant 0 : i32
    return %arg0, %c0_i32, %c0_i32_0, %c0_i32_1, %c0_i32_2 : i32, i32, i32, i32, i32
  }
}

</mosaic_0001>

<llo_original>
// kernel: tpu_custom_call.1
$region0: #{tpu_custom_call.1}
  #allocation0 [shape = 'u32[]', space=smem, size = 0x4, offset = 0x4, fixed_abs, tag = 'smem constant byte address 0x4 - core index']
  #allocation1 [shape = 'u32[144,128]{1,0:T(1,128)}', space=vmem, size = 0x12000, scoped, tag = 'internal scratch']
  #allocation2 [shape = 'bf16[18,16,24]{2,1,0:T(8,128)(2,1)}', space=vmem, size = 0x12000, scoped, tag = 'scratch operand']
  %s0 = inlined_call_operand.vmem [shape: bf16[2,16,16,8], index: 0, kind: input, shape index: {}]
  %s1 = inlined_call_operand.vmem [shape: bf16[5,24,32], index: 1, kind: input, shape index: {}]
  %s2 = inlined_call_operand.vmem [shape: f32[1,32], index: 2, kind: input, shape index: {}]
  %s3 = inlined_call_operand.hbm [shape: f32[2,16,2,16,32], index: 3, kind: output, shape index: {}]
  %s4 = sld [smem:[#allocation0]]
  $region45: #{tpu_custom_call.1} parent=0
    _
  %s6 = ssub.s32 1, %s4
  %s7 = scalar_select 0, %s6, %s4
  $region1: #{tpu_custom_call.1} parent=0
    #allocation3 [shape = 'u8[524288]{0}', space=vmem, size = 0x80000, scoped, tag = 'output window, operand 0']
    #allocation4 [shape = 's32[2]{0}', space=sflag, size = 0x8, scoped, tag = 'scoped memory for tpu_custom_call.1']
    %8 = vsyncpa [#allocation4], 0
    %s9 = scalar_lea.sflag [#allocation4], 1
    %10 = vsyncpa %s9, 0
    loop: start=0, step=1, limit=4
    $region2: #{tpu_custom_call.1} parent=1 // loop_pre_header
      _
    $region3: #{tpu_custom_call.1} parent=1 // loop_header
      %s12 = sphi 0, %s16
      %p13 = scmp.ge.s32.totalorder %s12, 4
      %s22 = sphi 0, %s24
      %s25 = sphi 0, %s22
      %s26 = sphi 0, %s25
      %s42 = sphi 0, %s26
      %s46 = sphi 0, %s46
      %s48 = sphi 0, %s46
      %s49 = sphi 0, %s48
      %s63 = sphi 0, %s49
      %s67 = sphi 0, %s67
      %s69 = sphi 0, %s67
      %s70 = sphi 0, %s69
      %s84 = sphi 0, %s70
      %s90 = sphi 0, %s92
      %s93 = sphi 0, %s90
      %s94 = sphi 0, %s93
      %s110 = sphi 0, %s94
    $region4: #{tpu_custom_call.1} parent=1 // loop_header_branch
      %15 = sbr.rel (%p13) target = $region8
    $region5: #{tpu_custom_call.1} parent=1 // loop_body
      %s17 = ssub.s32 %s12, 1
      %s18 = ssub.s32 %s12, 2
      %s19 = sadd.s32 %s12, 1
      %s20 = ssub.s32 %s12, %s19
      %p21 = scmp.eq.s32.totalorder %s20, 0
      %s23 = sadd.s32 %s22, 1
      %s24 = scalar_select %p21, %s22, %s23
      %p27 = pneg %p21
      %p28 = scmp.eq.s32.totalorder %s12, 1
      %p29 = por %p27, %p28
      %p30 = scmp.ne.s32.totalorder %s22, %s25
      %p31 = scmp.eq.s32.totalorder %s12, 0
      %p32 = por %p30, %p31
      %p33 = scmp.ne.s32.totalorder %s22, %s25
      %p34 = scmp.eq.s32.totalorder %s17, 1
      %p35 = por %p33, %p34
      %p36 = scmp.ne.s32.totalorder %s25, %s26
      %p37 = scmp.eq.s32.totalorder %s17, 0
      %p38 = por %p36, %p37
      %p39 = scmp.ne.s32.totalorder %s25, %s26
      %p40 = scmp.eq.s32.totalorder %s18, 1
      %p41 = por %p39, %p40
      %p43 = scmp.ne.s32.totalorder %s26, %s42
      %p44 = scmp.eq.s32.totalorder %s18, 0
      %p45 = por %p43, %p44
      %s47 = sadd.s32 %s46, 1
      %p50 = scmp.eq.s32.totalorder %s12, 1
      %p51 = scmp.ne.s32.totalorder %s46, %s48
      %p52 = scmp.eq.s32.totalorder %s12, 0
      %p53 = por %p51, %p52
      %p54 = scmp.ne.s32.totalorder %s46, %s48
      %p55 = scmp.eq.s32.totalorder %s17, 1
      %p56 = por %p54, %p55
      %p57 = scmp.ne.s32.totalorder %s48, %s49
      %p58 = scmp.eq.s32.totalorder %s17, 0
      %p59 = por %p57, %p58
      %p60 = scmp.ne.s32.totalorder %s48, %s49
      %p61 = scmp.eq.s32.totalorder %s18, 1
      %p62 = por %p60, %p61
      %p64 = scmp.ne.s32.totalorder %s49, %s63
      %p65 = scmp.eq.s32.totalorder %s18, 0
      %p66 = por %p64, %p65
      %s68 = sadd.s32 %s67, 1
      %p71 = scmp.eq.s32.totalorder %s12, 1
      %p72 = scmp.ne.s32.totalorder %s67, %s69
      %p73 = scmp.eq.s32.totalorder %s12, 0
      %p74 = por %p72, %p73
      %p75 = scmp.ne.s32.totalorder %s67, %s69
      %p76 = scmp.eq.s32.totalorder %s17, 1
      %p77 = por %p75, %p76
      %p78 = scmp.ne.s32.totalorder %s69, %s70
      %p79 = scmp.eq.s32.totalorder %s17, 0
      %p80 = por %p78, %p79
      %p81 = scmp.ne.s32.totalorder %s69, %s70
      %p82 = scmp.eq.s32.totalorder %s18, 1
      %p83 = por %p81, %p82
      %p85 = scmp.ne.s32.totalorder %s70, %s84
      %p86 = scmp.eq.s32.totalorder %s18, 0
      %p87 = por %p85, %p86
      %s88 = ssub.s32 %s12, %s19
      %p89 = scmp.eq.s32.totalorder %s88, 0
      %s91 = sadd.s32 %s90, 1
      %s92 = scalar_select %p89, %s90, %s91
      %p95 = pneg %p89
      %p96 = scmp.eq.s32.totalorder %s12, 1
      %p97 = por %p95, %p96
      %p98 = scmp.ne.s32.totalorder %s90, %s93
      %p99 = scmp.eq.s32.totalorder %s12, 0
      %p100 = por %p98, %p99
      %p101 = scmp.ne.s32.totalorder %s90, %s93
      %p102 = scmp.eq.s32.totalorder %s17, 1
      %p103 = por %p101, %p102
      %p104 = scmp.ne.s32.totalorder %s93, %s94
      %p105 = scmp.eq.s32.totalorder %s17, 0
      %p106 = por %p104, %p105
      %p107 = scmp.ne.s32.totalorder %s93, %s94
      %p108 = scmp.eq.s32.totalorder %s18, 1
      %p109 = por %p107, %p108
      %p111 = scmp.ne.s32.totalorder %s94, %s110
      %p112 = scmp.eq.s32.totalorder %s18, 0
      %p113 = por %p111, %p112
      %p114 = scmp.le.s32.totalorder 1, %s12
      %p115 = scmp.lt.s32.totalorder %s12, 3
      %p116 = pnand %p114, %p115
      %p117 = pneg %p116
      // Predicated region
      $region9: #{tpu_custom_call.1} parent=5 // pred_check
        _
      $region10: #{tpu_custom_call.1} parent=5 // pred_check_branch
        %119 = sbr.rel (%p116) target = $region12
      $region11: #{tpu_custom_call.1} parent=5 // pred_region
        %s120 = ssub.s32 %s12, 1
        // Predicated region
        $region13: #{tpu_custom_call.1} parent=11 // pred_check
          %p121 = pneg %p59
        $region14: #{tpu_custom_call.1} parent=11 // pred_check_branch
          %123 = sbr.rel (%p121) target = $region16
        $region15: #{tpu_custom_call.1} parent=11 // pred_region
          _
        $region16: #{tpu_custom_call.1} parent=11 // pred_fallthru
          _
        // Predicated region
        $region17: #{tpu_custom_call.1} parent=11 // pred_check
          %p124 = pneg %p80
        $region18: #{tpu_custom_call.1} parent=11 // pred_check_branch
          %126 = sbr.rel (%p124) target = $region20
        $region19: #{tpu_custom_call.1} parent=11 // pred_region
          _
        $region20: #{tpu_custom_call.1} parent=11 // pred_fallthru
          _
      $region12: #{tpu_custom_call.1} parent=5 // pred_fallthru
        _
      %p127 = scmp.lt.s32.totalorder %s12, 2
      // Predicated region
      $region21: #{tpu_custom_call.1} parent=5 // pred_check
        %p128 = pneg %p127
      $region22: #{tpu_custom_call.1} parent=5 // pred_check_branch
        %130 = sbr.rel (%p128) target = $region24
      $region23: #{tpu_custom_call.1} parent=5 // pred_region
        // Predicated region
        $region25: #{tpu_custom_call.1} parent=23 // pred_check
          %p131 = pneg %p32
        $region26: #{tpu_custom_call.1} parent=23 // pred_check_branch
          %133 = sbr.rel (%p131) target = $region28
        $region27: #{tpu_custom_call.1} parent=23 // pred_region
          %p134 = scmp.lt.s32.totalorder %s12, 1
          %s135 = scalar_select %p134, %s12, 1
          %s136 = smul.addr %s135, 32
          %s137 = smul.addr %s136, 4
          %s138 = scalar_lea.vmem %s0, %s137
        $region28: #{tpu_custom_call.1} parent=23 // pred_fallthru
          _
      $region24: #{tpu_custom_call.1} parent=5 // pred_fallthru
        _
      %p139 = scmp.le.s32.totalorder 1, %s12
      %p140 = scmp.lt.s32.totalorder %s12, 3
      %p141 = pnand %p139, %p140
      %p142 = pneg %p141
      // Predicated region
      $region29: #{tpu_custom_call.1} parent=5 // pred_check
        _
      $region30: #{tpu_custom_call.1} parent=5 // pred_check_branch
        %144 = sbr.rel (%p141) target = $region32
      $region31: #{tpu_custom_call.1} parent=5 // pred_region
        %s145 = ssub.s32 %s12, 1
        %p146 = scmp.lt.s32.totalorder %s17, 1
        %s147 = scalar_select %p146, %s17, 1
        %s148 = smul.addr %s147, 32
        %s149 = smul.addr %s148, 4
        %s150 = scalar_lea.vmem %s0, %s149
        %p151 = pneg %p38
        %p152 = pneg %p35
        %p153 = pneg %p59
        %p154 = pneg %p56
        %p155 = pneg %p80
        %p156 = pneg %p77
        %p157 = pneg %p106
        %p158 = pneg %p103
        %s159 = sand.u32 %s93, 1
        %s160 = scalar_lea.sflag [#allocation4], %s159
        %s161 = sand.u32 %s93, 1
        %s162 = smul.addr %s161, 512
        %s163 = scalar_lea.vmem [#allocation3], %s162
        %p164 = scmp.lt.s32.totalorder %s17, 1
        %s165 = scalar_select %p164, %s17, 1
        %s166 = smul.addr %s165, 32
        %s167 = smul.addr %s166, 4
        %s168 = scalar_lea.vmem %s0, %s167
        %vm170 = vcmask 191488
        %171 = vst.msk [vmem:[#allocation2] sm:$0xf] %vm170, 0
        %172 = vst.msk [vmem:[#allocation2 + $0x4] sm:$0xf] %vm170, 0
        %s173 = scalar_lea.vmem [#allocation2], 136
        %174 = vst.msk [vmem:[%s173] sm:$0xf] %vm170, 0
        %175 = vst.msk [vmem:[%s173 + $0x4] sm:$0xf] %vm170, 0
        %s176 = scalar_lea.vmem [#allocation2], 8
        %vm177 = vcmask 57344
        %vm178 = vsmask.f32 256
        %vm179 = vmand %vm177, %vm178
        %v180 = vld [vmem:[%s176] sm:$0x1]
        %v181 = vsel %vm179, 0, %v180
        %182 = vst [vmem:[%s176] sm:$0x1] %v181
        %v183 = vld [vmem:[%s176 + $0x8] sm:$0x1]
        %v184 = vsel %vm179, 0, %v183
        %185 = vst [vmem:[%s176 + $0x8] sm:$0x1] %v184
        %v186 = vld [vmem:[%s176 + $0x10] sm:$0x1]
        %v187 = vsel %vm179, 0, %v186
        %188 = vst [vmem:[%s176 + $0x10] sm:$0x1] %v187
        %v189 = vld [vmem:[%s176 + $0x18] sm:$0x1]
        %v190 = vsel %vm179, 0, %v189
        %191 = vst [vmem:[%s176 + $0x18] sm:$0x1] %v190
        %v192 = vld [vmem:[%s176 + $0x20] sm:$0x1]
        %v193 = vsel %vm179, 0, %v192
        %194 = vst [vmem:[%s176 + $0x20] sm:$0x1] %v193
        %v195 = vld [vmem:[%s176 + $0x28] sm:$0x1]
        %v196 = vsel %vm179, 0, %v195
        %197 = vst [vmem:[%s176 + $0x28] sm:$0x1] %v196
        %v198 = vld [vmem:[%s176 + $0x30] sm:$0x1]
        %v199 = vsel %vm179, 0, %v198
        %200 = vst [vmem:[%s176 + $0x30] sm:$0x1] %v199
        %v201 = vld [vmem:[%s176 + $0x38] sm:$0x1]
        %v202 = vsel %vm179, 0, %v201
        %203 = vst [vmem:[%s176 + $0x38] sm:$0x1] %v202
        %v204 = vld [vmem:[%s176 + $0x40] sm:$0x1]
        %v205 = vsel %vm179, 0, %v204
        %206 = vst [vmem:[%s176 + $0x40] sm:$0x1] %v205
        %v207 = vld [vmem:[%s176 + $0x48] sm:$0x1]
        %v208 = vsel %vm179, 0, %v207
        %209 = vst [vmem:[%s176 + $0x48] sm:$0x1] %v208
        %v210 = vld [vmem:[%s176 + $0x50] sm:$0x1]
        %v211 = vsel %vm179, 0, %v210
        %212 = vst [vmem:[%s176 + $0x50] sm:$0x1] %v211
        %v213 = vld [vmem:[%s176 + $0x58] sm:$0x1]
        %v214 = vsel %vm179, 0, %v213
        %215 = vst [vmem:[%s176 + $0x58] sm:$0x1] %v214
        %v216 = vld [vmem:[%s176 + $0x60] sm:$0x1]
        %v217 = vsel %vm179, 0, %v216
        %218 = vst [vmem:[%s176 + $0x60] sm:$0x1] %v217
        %v219 = vld [vmem:[%s176 + $0x68] sm:$0x1]
        %v220 = vsel %vm179, 0, %v219
        %221 = vst [vmem:[%s176 + $0x68] sm:$0x1] %v220
        %v222 = vld [vmem:[%s176 + $0x70] sm:$0x1]
        %v223 = vsel %vm179, 0, %v222
        %224 = vst [vmem:[%s176 + $0x70] sm:$0x1] %v223
        %v225 = vld [vmem:[%s176 + $0x78] sm:$0x1]
        %v226 = vsel %vm179, 0, %v225
        %227 = vst [vmem:[%s176 + $0x78] sm:$0x1] %v226
        %vm228 = vcmask 191619
        %vm229 = vsmask.f32 7950
        %vm230 = vmand %vm228, %vm229
        %v231 = vld [vmem:[%s176 + $0x4] sm:$0x8]
        %v232 = vsel %vm230, 0, %v231
        %233 = vst [vmem:[%s176 + $0x4] sm:$0x8] %v232
        %v234 = vld [vmem:[%s176 + $0xc] sm:$0x8]
        %v235 = vsel %vm230, 0, %v234
        %236 = vst [vmem:[%s176 + $0xc] sm:$0x8] %v235
        %v237 = vld [vmem:[%s176 + $0x14] sm:$0x8]
        %v238 = vsel %vm230, 0, %v237
        %239 = vst [vmem:[%s176 + $0x14] sm:$0x8] %v238
        %v240 = vld [vmem:[%s176 + $0x1c] sm:$0x8]
        %v241 = vsel %vm230, 0, %v240
        %242 = vst [vmem:[%s176 + $0x1c] sm:$0x8] %v241
        %v243 = vld [vmem:[%s176 + $0x24] sm:$0x8]
        %v244 = vsel %vm230, 0, %v243
        %245 = vst [vmem:[%s176 + $0x24] sm:$0x8] %v244
        %v246 = vld [vmem:[%s176 + $0x2c] sm:$0x8]
        %v247 = vsel %vm230, 0, %v246
        %248 = vst [vmem:[%s176 + $0x2c] sm:$0x8] %v247
        %v249 = vld [vmem:[%s176 + $0x34] sm:$0x8]
        %v250 = vsel %vm230, 0, %v249
        %251 = vst [vmem:[%s176 + $0x34] sm:$0x8] %v250
        %v252 = vld [vmem:[%s176 + $0x3c] sm:$0x8]
        %v253 = vsel %vm230, 0, %v252
        %254 = vst [vmem:[%s176 + $0x3c] sm:$0x8] %v253
        %v255 = vld [vmem:[%s176 + $0x44] sm:$0x8]
        %v256 = vsel %vm230, 0, %v255
        %257 = vst [vmem:[%s176 + $0x44] sm:$0x8] %v256
        %v258 = vld [vmem:[%s176 + $0x4c] sm:$0x8]
        %v259 = vsel %vm230, 0, %v258
        %260 = vst [vmem:[%s176 + $0x4c] sm:$0x8] %v259
        %v261 = vld [vmem:[%s176 + $0x54] sm:$0x8]
        %v262 = vsel %vm230, 0, %v261
        %263 = vst [vmem:[%s176 + $0x54] sm:$0x8] %v262
        %v264 = vld [vmem:[%s176 + $0x5c] sm:$0x8]
        %v265 = vsel %vm230, 0, %v264
        %266 = vst [vmem:[%s176 + $0x5c] sm:$0x8] %v265
        %v267 = vld [vmem:[%s176 + $0x64] sm:$0x8]
        %v268 = vsel %vm230, 0, %v267
        %269 = vst [vmem:[%s176 + $0x64] sm:$0x8] %v268
        %v270 = vld [vmem:[%s176 + $0x6c] sm:$0x8]
        %v271 = vsel %vm230, 0, %v270
        %272 = vst [vmem:[%s176 + $0x6c] sm:$0x8] %v271
        %v273 = vld [vmem:[%s176 + $0x74] sm:$0x8]
        %v274 = vsel %vm230, 0, %v273
        %275 = vst [vmem:[%s176 + $0x74] sm:$0x8] %v274
        %v276 = vld [vmem:[%s176 + $0x7c] sm:$0x8]
        %v277 = vsel %vm230, 0, %v276
        %278 = vst [vmem:[%s176 + $0x7c] sm:$0x8] %v277
        %v279 = vld [vmem:[%s168] sm:$0xf]
        %v280 = vld [vmem:[%s168 + $0x4] sm:$0xf]
        %v281 = vld [vmem:[%s168 + $0x8] sm:$0xf]
        %v282 = vld [vmem:[%s168 + $0xc] sm:$0xf]
        %v283 = vld [vmem:[%s168 + $0x10] sm:$0xf]
        %v284 = vld [vmem:[%s168 + $0x14] sm:$0xf]
        %v285 = vld [vmem:[%s168 + $0x18] sm:$0xf]
        %v286 = vld [vmem:[%s168 + $0x1c] sm:$0xf]
        %v287 = vld [vmem:[%s168 + $0x20] sm:$0xf]
        %v288 = vld [vmem:[%s168 + $0x24] sm:$0xf]
        %v289 = vld [vmem:[%s168 + $0x28] sm:$0xf]
        %v290 = vld [vmem:[%s168 + $0x2c] sm:$0xf]
        %v291 = vld [vmem:[%s168 + $0x30] sm:$0xf]
        %v292 = vld [vmem:[%s168 + $0x34] sm:$0xf]
        %v293 = vld [vmem:[%s168 + $0x38] sm:$0xf]
        %v294 = vld [vmem:[%s168 + $0x3c] sm:$0xf]
        %v295 = vld [vmem:[%s168 + $0x40] sm:$0xf]
        %v296 = vld [vmem:[%s168 + $0x44] sm:$0xf]
        %v297 = vld [vmem:[%s168 + $0x48] sm:$0xf]
        %v298 = vld [vmem:[%s168 + $0x4c] sm:$0xf]
        %v299 = vld [vmem:[%s168 + $0x50] sm:$0xf]
        %v300 = vld [vmem:[%s168 + $0x54] sm:$0xf]
        %v301 = vld [vmem:[%s168 + $0x58] sm:$0xf]
        %v302 = vld [vmem:[%s168 + $0x5c] sm:$0xf]
        %v303 = vld [vmem:[%s168 + $0x60] sm:$0xf]
        %v304 = vld [vmem:[%s168 + $0x64] sm:$0xf]
        %v305 = vld [vmem:[%s168 + $0x68] sm:$0xf]
        %v306 = vld [vmem:[%s168 + $0x6c] sm:$0xf]
        %v307 = vld [vmem:[%s168 + $0x70] sm:$0xf]
        %v308 = vld [vmem:[%s168 + $0x74] sm:$0xf]
        %v309 = vld [vmem:[%s168 + $0x78] sm:$0xf]
        %v310 = vld [vmem:[%s168 + $0x7c] sm:$0xf]
        %vm311 = vsmask.f32 4368
        %vm312 = vmor %vm178, %vm311
        %v314 = vshrl.u32 %v279, 16
        %v316 = vrot.slane %v314, 7
        %v317 = vshll.u32 %v279, 16
        %v319 = vor.u32 %v316, %v317
        %v320 = vrot.slane %v316, 4
        %v322 = vshrl.u32 %v280, 16
        %v324 = vrot.slane %v322, 7
        %v325 = vshll.u32 %v280, 16
        %v327 = vor.u32 %v324, %v325
        %v328 = vsel %vm312, %v320, %v327
        %v330 = vshrl.u32 %v281, 16
        %v332 = vrot.slane %v330, 7
        %v333 = vshll.u32 %v281, 16
        %v335 = vor.u32 %v332, %v333
        %v336 = vrot.slane %v332, 4
        %v338 = vshrl.u32 %v282, 16
        %v340 = vrot.slane %v338, 7
        %v341 = vshll.u32 %v282, 16
        %v343 = vor.u32 %v340, %v341
        %v344 = vsel %vm312, %v336, %v343
        %v346 = vshrl.u32 %v283, 16
        %v348 = vrot.slane %v346, 7
        %v349 = vshll.u32 %v283, 16
        %v351 = vor.u32 %v348, %v349
        %v352 = vrot.slane %v348, 4
        %v354 = vshrl.u32 %v284, 16
        %v356 = vrot.slane %v354, 7
        %v357 = vshll.u32 %v284, 16
        %v359 = vor.u32 %v356, %v357
        %v360 = vsel %vm312, %v352, %v359
        %v362 = vshrl.u32 %v285, 16
        %v364 = vrot.slane %v362, 7
        %v365 = vshll.u32 %v285, 16
        %v367 = vor.u32 %v364, %v365
        %v368 = vrot.slane %v364, 4
        %v370 = vshrl.u32 %v286, 16
        %v372 = vrot.slane %v370, 7
        %v373 = vshll.u32 %v286, 16
        %v375 = vor.u32 %v372, %v373
        %v376 = vsel %vm312, %v368, %v375
        %v378 = vshrl.u32 %v287, 16
        %v380 = vrot.slane %v378, 7
        %v381 = vshll.u32 %v287, 16
        %v383 = vor.u32 %v380, %v381
        %v384 = vrot.slane %v380, 4
        %v386 = vshrl.u32 %v288, 16
        %v388 = vrot.slane %v386, 7
        %v389 = vshll.u32 %v288, 16
        %v391 = vor.u32 %v388, %v389
        %v392 = vsel %vm312, %v384, %v391
        %v394 = vshrl.u32 %v289, 16
        %v396 = vrot.slane %v394, 7
        %v397 = vshll.u32 %v289, 16
        %v399 = vor.u32 %v396, %v397
        %v400 = vrot.slane %v396, 4
        %v402 = vshrl.u32 %v290, 16
        %v404 = vrot.slane %v402, 7
        %v405 = vshll.u32 %v290, 16
        %v407 = vor.u32 %v404, %v405
        %v408 = vsel %vm312, %v400, %v407
        %v410 = vshrl.u32 %v291, 16
        %v412 = vrot.slane %v410, 7
        %v413 = vshll.u32 %v291, 16
        %v415 = vor.u32 %v412, %v413
        %v416 = vrot.slane %v412, 4
        %v418 = vshrl.u32 %v292, 16
        %v420 = vrot.slane %v418, 7
        %v421 = vshll.u32 %v292, 16
        %v423 = vor.u32 %v420, %v421
        %v424 = vsel %vm312, %v416, %v423
        %v426 = vshrl.u32 %v293, 16
        %v428 = vrot.slane %v426, 7
        %v429 = vshll.u32 %v293, 16
        %v431 = vor.u32 %v428, %v429
        %v432 = vrot.slane %v428, 4
        %v434 = vshrl.u32 %v294, 16
        %v436 = vrot.slane %v434, 7
        %v437 = vshll.u32 %v294, 16
        %v439 = vor.u32 %v436, %v437
        %v440 = vsel %vm312, %v432, %v439
        %v442 = vshrl.u32 %v295, 16
        %v444 = vrot.slane %v442, 7
        %v445 = vshll.u32 %v295, 16
        %v447 = vor.u32 %v444, %v445
        %v448 = vrot.slane %v444, 4
        %v450 = vshrl.u32 %v296, 16
        %v452 = vrot.slane %v450, 7
        %v453 = vshll.u32 %v296, 16
        %v455 = vor.u32 %v452, %v453
        %v456 = vsel %vm312, %v448, %v455
        %v458 = vshrl.u32 %v297, 16
        %v460 = vrot.slane %v458, 7
        %v461 = vshll.u32 %v297, 16
        %v463 = vor.u32 %v460, %v461
        %v464 = vrot.slane %v460, 4
        %v466 = vshrl.u32 %v298, 16
        %v468 = vrot.slane %v466, 7
        %v469 = vshll.u32 %v298, 16
        %v471 = vor.u32 %v468, %v469
        %v472 = vsel %vm312, %v464, %v471
        %v474 = vshrl.u32 %v299, 16
        %v476 = vrot.slane %v474, 7
        %v477 = vshll.u32 %v299, 16
        %v479 = vor.u32 %v476, %v477
        %v480 = vrot.slane %v476, 4
        %v482 = vshrl.u32 %v300, 16
        %v484 = vrot.slane %v482, 7
        %v485 = vshll.u32 %v300, 16
        %v487 = vor.u32 %v484, %v485
        %v488 = vsel %vm312, %v480, %v487
        %v490 = vshrl.u32 %v301, 16
        %v492 = vrot.slane %v490, 7
        %v493 = vshll.u32 %v301, 16
        %v495 = vor.u32 %v492, %v493
        %v496 = vrot.slane %v492, 4
        %v498 = vshrl.u32 %v302, 16
        %v500 = vrot.slane %v498, 7
        %v501 = vshll.u32 %v302, 16
        %v503 = vor.u32 %v500, %v501
        %v504 = vsel %vm312, %v496, %v503
        %v506 = vshrl.u32 %v303, 16
        %v508 = vrot.slane %v506, 7
        %v509 = vshll.u32 %v303, 16
        %v511 = vor.u32 %v508, %v509
        %v512 = vrot.slane %v508, 4
        %v514 = vshrl.u32 %v304, 16
        %v516 = vrot.slane %v514, 7
        %v517 = vshll.u32 %v304, 16
        %v519 = vor.u32 %v516, %v517
        %v520 = vsel %vm312, %v512, %v519
        %v522 = vshrl.u32 %v305, 16
        %v524 = vrot.slane %v522, 7
        %v525 = vshll.u32 %v305, 16
        %v527 = vor.u32 %v524, %v525
        %v528 = vrot.slane %v524, 4
        %v530 = vshrl.u32 %v306, 16
        %v532 = vrot.slane %v530, 7
        %v533 = vshll.u32 %v306, 16
        %v535 = vor.u32 %v532, %v533
        %v536 = vsel %vm312, %v528, %v535
        %v538 = vshrl.u32 %v307, 16
        %v540 = vrot.slane %v538, 7
        %v541 = vshll.u32 %v307, 16
        %v543 = vor.u32 %v540, %v541
        %v544 = vrot.slane %v540, 4
        %v546 = vshrl.u32 %v308, 16
        %v548 = vrot.slane %v546, 7
        %v549 = vshll.u32 %v308, 16
        %v551 = vor.u32 %v548, %v549
        %v552 = vsel %vm312, %v544, %v551
        %v554 = vshrl.u32 %v309, 16
        %v556 = vrot.slane %v554, 7
        %v557 = vshll.u32 %v309, 16
        %v559 = vor.u32 %v556, %v557
        %v560 = vrot.slane %v556, 4
        %v562 = vshrl.u32 %v310, 16
        %v564 = vrot.slane %v562, 7
        %v565 = vshll.u32 %v310, 16
        %v567 = vor.u32 %v564, %v565
        %v568 = vsel %vm312, %v560, %v567
        %vm601 = vcmask 60416
        %vm602 = vsmask.f32 7938
        %vm603 = vmand %vm601, %vm602
        %v604 = vld [vmem:[%s176] sm:$0xf]
        %v605 = vsel %vm603, %v319, %v604
        %606 = vst [vmem:[%s176] sm:$0xf] %v605
        %vm607 = vcmask 60416
        %608 = vst.msk [vmem:[%s176 + $0x4] sm:$0xf] %vm607, %v328
        %v609 = vld [vmem:[%s176 + $0x8] sm:$0xf]
        %v610 = vsel %vm603, %v335, %v609
        %611 = vst [vmem:[%s176 + $0x8] sm:$0xf] %v610
        %612 = vst.msk [vmem:[%s176 + $0xc] sm:$0xf] %vm607, %v344
        %v613 = vld [vmem:[%s176 + $0x10] sm:$0xf]
        %v614 = vsel %vm603, %v351, %v613
        %615 = vst [vmem:[%s176 + $0x10] sm:$0xf] %v614
        %616 = vst.msk [vmem:[%s176 + $0x14] sm:$0xf] %vm607, %v360
        %v617 = vld [vmem:[%s176 + $0x18] sm:$0xf]
        %v618 = vsel %vm603, %v367, %v617
        %619 = vst [vmem:[%s176 + $0x18] sm:$0xf] %v618
        %620 = vst.msk [vmem:[%s176 + $0x1c] sm:$0xf] %vm607, %v376
        %v621 = vld [vmem:[%s176 + $0x20] sm:$0xf]
        %v622 = vsel %vm603, %v383, %v621
        %623 = vst [vmem:[%s176 + $0x20] sm:$0xf] %v622
        %624 = vst.msk [vmem:[%s176 + $0x24] sm:$0xf] %vm607, %v392
        %v625 = vld [vmem:[%s176 + $0x28] sm:$0xf]
        %v626 = vsel %vm603, %v399, %v625
        %627 = vst [vmem:[%s176 + $0x28] sm:$0xf] %v626
        %628 = vst.msk [vmem:[%s176 + $0x2c] sm:$0xf] %vm607, %v408
        %v629 = vld [vmem:[%s176 + $0x30] sm:$0xf]
        %v630 = vsel %vm603, %v415, %v629
        %631 = vst [vmem:[%s176 + $0x30] sm:$0xf] %v630
        %632 = vst.msk [vmem:[%s176 + $0x34] sm:$0xf] %vm607, %v424
        %v633 = vld [vmem:[%s176 + $0x38] sm:$0xf]
        %v634 = vsel %vm603, %v431, %v633
        %635 = vst [vmem:[%s176 + $0x38] sm:$0xf] %v634
        %636 = vst.msk [vmem:[%s176 + $0x3c] sm:$0xf] %vm607, %v440
        %v637 = vld [vmem:[%s176 + $0x40] sm:$0xf]
        %v638 = vsel %vm603, %v447, %v637
        %639 = vst [vmem:[%s176 + $0x40] sm:$0xf] %v638
        %640 = vst.msk [vmem:[%s176 + $0x44] sm:$0xf] %vm607, %v456
        %v641 = vld [vmem:[%s176 + $0x48] sm:$0xf]
        %v642 = vsel %vm603, %v463, %v641
        %643 = vst [vmem:[%s176 + $0x48] sm:$0xf] %v642
        %644 = vst.msk [vmem:[%s176 + $0x4c] sm:$0xf] %vm607, %v472
        %v645 = vld [vmem:[%s176 + $0x50] sm:$0xf]
        %v646 = vsel %vm603, %v479, %v645
        %647 = vst [vmem:[%s176 + $0x50] sm:$0xf] %v646
        %648 = vst.msk [vmem:[%s176 + $0x54] sm:$0xf] %vm607, %v488
        %v649 = vld [vmem:[%s176 + $0x58] sm:$0xf]
        %v650 = vsel %vm603, %v495, %v649
        %651 = vst [vmem:[%s176 + $0x58] sm:$0xf] %v650
        %652 = vst.msk [vmem:[%s176 + $0x5c] sm:$0xf] %vm607, %v504
        %v653 = vld [vmem:[%s176 + $0x60] sm:$0xf]
        %v654 = vsel %vm603, %v511, %v653
        %655 = vst [vmem:[%s176 + $0x60] sm:$0xf] %v654
        %656 = vst.msk [vmem:[%s176 + $0x64] sm:$0xf] %vm607, %v520
        %v657 = vld [vmem:[%s176 + $0x68] sm:$0xf]
        %v658 = vsel %vm603, %v527, %v657
        %659 = vst [vmem:[%s176 + $0x68] sm:$0xf] %v658
        %660 = vst.msk [vmem:[%s176 + $0x6c] sm:$0xf] %vm607, %v536
        %v661 = vld [vmem:[%s176 + $0x70] sm:$0xf]
        %v662 = vsel %vm603, %v543, %v661
        %663 = vst [vmem:[%s176 + $0x70] sm:$0xf] %v662
        %664 = vst.msk [vmem:[%s176 + $0x74] sm:$0xf] %vm607, %v552
        %v665 = vld [vmem:[%s176 + $0x78] sm:$0xf]
        %v666 = vsel %vm603, %v559, %v665
        %667 = vst [vmem:[%s176 + $0x78] sm:$0xf] %v666
        %668 = vst.msk [vmem:[%s176 + $0x7c] sm:$0xf] %vm607, %v568
        %701 = vrot.lane.b32.xlu0 %v279, 8
        %v702 = vpop.permute.xlu0 %701
        %703 = vrot.lane.b32.xlu0 %v280, 8
        %v704 = vpop.permute.xlu0 %703
        %705 = vrot.lane.b32.xlu0 %v281, 8
        %v706 = vpop.permute.xlu0 %705
        %707 = vrot.lane.b32.xlu0 %v282, 8
        %v708 = vpop.permute.xlu0 %707
        %709 = vrot.lane.b32.xlu0 %v283, 8
        %v710 = vpop.permute.xlu0 %709
        %711 = vrot.lane.b32.xlu0 %v284, 8
        %v712 = vpop.permute.xlu0 %711
        %713 = vrot.lane.b32.xlu0 %v285, 8
        %v714 = vpop.permute.xlu0 %713
        %715 = vrot.lane.b32.xlu0 %v286, 8
        %v716 = vpop.permute.xlu0 %715
        %717 = vrot.lane.b32.xlu0 %v287, 8
        %v718 = vpop.permute.xlu0 %717
        %719 = vrot.lane.b32.xlu0 %v288, 8
        %v720 = vpop.permute.xlu0 %719
        %721 = vrot.lane.b32.xlu0 %v289, 8
        %v722 = vpop.permute.xlu0 %721
        %723 = vrot.lane.b32.xlu0 %v290, 8
        %v724 = vpop.permute.xlu0 %723
        %725 = vrot.lane.b32.xlu0 %v291, 8
        %v726 = vpop.permute.xlu0 %725
        %727 = vrot.lane.b32.xlu0 %v292, 8
        %v728 = vpop.permute.xlu0 %727
        %729 = vrot.lane.b32.xlu0 %v293, 8
        %v730 = vpop.permute.xlu0 %729
        %731 = vrot.lane.b32.xlu0 %v294, 8
        %v732 = vpop.permute.xlu0 %731
        %733 = vrot.lane.b32.xlu0 %v295, 8
        %v734 = vpop.permute.xlu0 %733
        %735 = vrot.lane.b32.xlu0 %v296, 8
        %v736 = vpop.permute.xlu0 %735
        %737 = vrot.lane.b32.xlu0 %v297, 8
        %v738 = vpop.permute.xlu0 %737
        %739 = vrot.lane.b32.xlu0 %v298, 8
        %v740 = vpop.permute.xlu0 %739
        %741 = vrot.lane.b32.xlu0 %v299, 8
        %v742 = vpop.permute.xlu0 %741
        %743 = vrot.lane.b32.xlu0 %v300, 8
        %v744 = vpop.permute.xlu0 %743
        %745 = vrot.lane.b32.xlu0 %v301, 8
        %v746 = vpop.permute.xlu0 %745
        %747 = vrot.lane.b32.xlu0 %v302, 8
        %v748 = vpop.permute.xlu0 %747
        %749 = vrot.lane.b32.xlu0 %v303, 8
        %v750 = vpop.permute.xlu0 %749
        %751 = vrot.lane.b32.xlu0 %v304, 8
        %v752 = vpop.permute.xlu0 %751
        %753 = vrot.lane.b32.xlu0 %v305, 8
        %v754 = vpop.permute.xlu0 %753
        %755 = vrot.lane.b32.xlu0 %v306, 8
        %v756 = vpop.permute.xlu0 %755
        %757 = vrot.lane.b32.xlu0 %v307, 8
        %v758 = vpop.permute.xlu0 %757
        %759 = vrot.lane.b32.xlu0 %v308, 8
        %v760 = vpop.permute.xlu0 %759
        %761 = vrot.lane.b32.xlu0 %v309, 8
        %v762 = vpop.permute.xlu0 %761
        %763 = vrot.lane.b32.xlu0 %v310, 8
        %v764 = vpop.permute.xlu0 %763
        %vm797 = vcmask 126016
        %798 = vst.msk [vmem:[%s176] sm:$0xf] %vm797, %v702
        %799 = vst.msk [vmem:[%s176 + $0x4] sm:$0xf] %vm797, %v704
        %800 = vst.msk [vmem:[%s176 + $0x8] sm:$0xf] %vm797, %v706
        %801 = vst.msk [vmem:[%s176 + $0xc] sm:$0xf] %vm797, %v708
        %802 = vst.msk [vmem:[%s176 + $0x10] sm:$0xf] %vm797, %v710
        %803 = vst.msk [vmem:[%s176 + $0x14] sm:$0xf] %vm797, %v712
        %804 = vst.msk [vmem:[%s176 + $0x18] sm:$0xf] %vm797, %v714
        %805 = vst.msk [vmem:[%s176 + $0x1c] sm:$0xf] %vm797, %v716
        %806 = vst.msk [vmem:[%s176 + $0x20] sm:$0xf] %vm797, %v718
        %807 = vst.msk [vmem:[%s176 + $0x24] sm:$0xf] %vm797, %v720
        %808 = vst.msk [vmem:[%s176 + $0x28] sm:$0xf] %vm797, %v722
        %809 = vst.msk [vmem:[%s176 + $0x2c] sm:$0xf] %vm797, %v724
        %810 = vst.msk [vmem:[%s176 + $0x30] sm:$0xf] %vm797, %v726
        %811 = vst.msk [vmem:[%s176 + $0x34] sm:$0xf] %vm797, %v728
        %812 = vst.msk [vmem:[%s176 + $0x38] sm:$0xf] %vm797, %v730
        %813 = vst.msk [vmem:[%s176 + $0x3c] sm:$0xf] %vm797, %v732
        %814 = vst.msk [vmem:[%s176 + $0x40] sm:$0xf] %vm797, %v734
        %815 = vst.msk [vmem:[%s176 + $0x44] sm:$0xf] %vm797, %v736
        %816 = vst.msk [vmem:[%s176 + $0x48] sm:$0xf] %vm797, %v738
        %817 = vst.msk [vmem:[%s176 + $0x4c] sm:$0xf] %vm797, %v740
        %818 = vst.msk [vmem:[%s176 + $0x50] sm:$0xf] %vm797, %v742
        %819 = vst.msk [vmem:[%s176 + $0x54] sm:$0xf] %vm797, %v744
        %820 = vst.msk [vmem:[%s176 + $0x58] sm:$0xf] %vm797, %v746
        %821 = vst.msk [vmem:[%s176 + $0x5c] sm:$0xf] %vm797, %v748
        %822 = vst.msk [vmem:[%s176 + $0x60] sm:$0xf] %vm797, %v750
        %823 = vst.msk [vmem:[%s176 + $0x64] sm:$0xf] %vm797, %v752
        %824 = vst.msk [vmem:[%s176 + $0x68] sm:$0xf] %vm797, %v754
        %825 = vst.msk [vmem:[%s176 + $0x6c] sm:$0xf] %vm797, %v756
        %826 = vst.msk [vmem:[%s176 + $0x70] sm:$0xf] %vm797, %v758
        %827 = vst.msk [vmem:[%s176 + $0x74] sm:$0xf] %vm797, %v760
        %828 = vst.msk [vmem:[%s176 + $0x78] sm:$0xf] %vm797, %v762
        %829 = vst.msk [vmem:[%s176 + $0x7c] sm:$0xf] %vm797, %v764
        %vm830 = vsmask.f32 3328
        %vm831 = vsmask.f32 7440
        %vm832 = vmor %vm830, %vm831
        %v833 = vrot.slane %v314, 4
        %v834 = vrot.slane %v317, 5
        %v835 = vor.u32 %v833, %v834
        %v836 = vrot.slane %v835, 4
        %v837 = vrot.slane %v325, 5
        %v838 = vsel %vm832, %v836, %v837
        %v839 = vrot.slane %v322, 4
        %v840 = vor.u32 %v839, %v837
        %v841 = vrot.slane %v840, 4
        %v842 = vrot.slane %v330, 4
        %v843 = vrot.slane %v333, 5
        %v844 = vor.u32 %v842, %v843
        %v845 = vrot.slane %v844, 4
        %v846 = vrot.slane %v341, 5
        %v847 = vsel %vm832, %v845, %v846
        %v848 = vrot.slane %v338, 4
        %v849 = vor.u32 %v848, %v846
        %v850 = vrot.slane %v849, 4
        %v851 = vrot.slane %v346, 4
        %v852 = vrot.slane %v349, 5
        %v853 = vor.u32 %v851, %v852
        %v854 = vrot.slane %v853, 4
        %v855 = vrot.slane %v357, 5
        %v856 = vsel %vm832, %v854, %v855
        %v857 = vrot.slane %v354, 4
        %v858 = vor.u32 %v857, %v855
        %v859 = vrot.slane %v858, 4
        %v860 = vrot.slane %v362, 4
        %v861 = vrot.slane %v365, 5
        %v862 = vor.u32 %v860, %v861
        %v863 = vrot.slane %v862, 4
        %v864 = vrot.slane %v373, 5
        %v865 = vsel %vm832, %v863, %v864
        %v866 = vrot.slane %v370, 4
        %v867 = vor.u32 %v866, %v864
        %v868 = vrot.slane %v867, 4
        %v869 = vrot.slane %v378, 4
        %v870 = vrot.slane %v381, 5
        %v871 = vor.u32 %v869, %v870
        %v872 = vrot.slane %v871, 4
        %v873 = vrot.slane %v389, 5
        %v874 = vsel %vm832, %v872, %v873
        %v875 = vrot.slane %v386, 4
        %v876 = vor.u32 %v875, %v873
        %v877 = vrot.slane %v876, 4
        %v878 = vrot.slane %v394, 4
        %v879 = vrot.slane %v397, 5
        %v880 = vor.u32 %v878, %v879
        %v881 = vrot.slane %v880, 4
        %v882 = vrot.slane %v405, 5
        %v883 = vsel %vm832, %v881, %v882
        %v884 = vrot.slane %v402, 4
        %v885 = vor.u32 %v884, %v882
        %v886 = vrot.slane %v885, 4
        %v887 = vrot.slane %v410, 4
        %v888 = vrot.slane %v413, 5
        %v889 = vor.u32 %v887, %v888
        %v890 = vrot.slane %v889, 4
        %v891 = vrot.slane %v421, 5
        %v892 = vsel %vm832, %v890, %v891
        %v893 = vrot.slane %v418, 4
        %v894 = vor.u32 %v893, %v891
        %v895 = vrot.slane %v894, 4
        %v896 = vrot.slane %v426, 4
        %v897 = vrot.slane %v429, 5
        %v898 = vor.u32 %v896, %v897
        %v899 = vrot.slane %v898, 4
        %v900 = vrot.slane %v437, 5
        %v901 = vsel %vm832, %v899, %v900
        %v902 = vrot.slane %v434, 4
        %v903 = vor.u32 %v902, %v900
        %v904 = vrot.slane %v903, 4
        %v905 = vrot.slane %v442, 4
        %v906 = vrot.slane %v445, 5
        %v907 = vor.u32 %v905, %v906
        %v908 = vrot.slane %v907, 4
        %v909 = vrot.slane %v453, 5
        %v910 = vsel %vm832, %v908, %v909
        %v911 = vrot.slane %v450, 4
        %v912 = vor.u32 %v911, %v909
        %v913 = vrot.slane %v912, 4
        %v914 = vrot.slane %v458, 4
        %v915 = vrot.slane %v461, 5
        %v916 = vor.u32 %v914, %v915
        %v917 = vrot.slane %v916, 4
        %v918 = vrot.slane %v469, 5
        %v919 = vsel %vm832, %v917, %v918
        %v920 = vrot.slane %v466, 4
        %v921 = vor.u32 %v920, %v918
        %v922 = vrot.slane %v921, 4
        %v923 = vrot.slane %v474, 4
        %v924 = vrot.slane %v477, 5
        %v925 = vor.u32 %v923, %v924
        %v926 = vrot.slane %v925, 4
        %v927 = vrot.slane %v485, 5
        %v928 = vsel %vm832, %v926, %v927
        %v929 = vrot.slane %v482, 4
        %v930 = vor.u32 %v929, %v927
        %v931 = vrot.slane %v930, 4
        %v932 = vrot.slane %v490, 4
        %v933 = vrot.slane %v493, 5
        %v934 = vor.u32 %v932, %v933
        %v935 = vrot.slane %v934, 4
        %v936 = vrot.slane %v501, 5
        %v937 = vsel %vm832, %v935, %v936
        %v938 = vrot.slane %v498, 4
        %v939 = vor.u32 %v938, %v936
        %v940 = vrot.slane %v939, 4
        %v941 = vrot.slane %v506, 4
        %v942 = vrot.slane %v509, 5
        %v943 = vor.u32 %v941, %v942
        %v944 = vrot.slane %v943, 4
        %v945 = vrot.slane %v517, 5
        %v946 = vsel %vm832, %v944, %v945
        %v947 = vrot.slane %v514, 4
        %v948 = vor.u32 %v947, %v945
        %v949 = vrot.slane %v948, 4
        %v950 = vrot.slane %v522, 4
        %v951 = vrot.slane %v525, 5
        %v952 = vor.u32 %v950, %v951
        %v953 = vrot.slane %v952, 4
        %v954 = vrot.slane %v533, 5
        %v955 = vsel %vm832, %v953, %v954
        %v956 = vrot.slane %v530, 4
        %v957 = vor.u32 %v956, %v954
        %v958 = vrot.slane %v957, 4
        %v959 = vrot.slane %v538, 4
        %v960 = vrot.slane %v541, 5
        %v961 = vor.u32 %v959, %v960
        %v962 = vrot.slane %v961, 4
        %v963 = vrot.slane %v549, 5
        %v964 = vsel %vm832, %v962, %v963
        %v965 = vrot.slane %v546, 4
        %v966 = vor.u32 %v965, %v963
        %v967 = vrot.slane %v966, 4
        %v968 = vrot.slane %v554, 4
        %v969 = vrot.slane %v557, 5
        %v970 = vor.u32 %v968, %v969
        %v971 = vrot.slane %v970, 4
        %v972 = vrot.slane %v565, 5
        %v973 = vsel %vm832, %v971, %v972
        %v974 = vrot.slane %v562, 4
        %v975 = vor.u32 %v974, %v972
        %v976 = vrot.slane %v975, 4
        %977 = vrot.lane.b32.xlu0 %v838, 16
        %v978 = vpop.permute.xlu0 %977
        %979 = vrot.lane.b32.xlu0 %v841, 16
        %v980 = vpop.permute.xlu0 %979
        %981 = vrot.lane.b32.xlu0 %v847, 16
        %v982 = vpop.permute.xlu0 %981
        %983 = vrot.lane.b32.xlu0 %v850, 16
        %v984 = vpop.permute.xlu0 %983
        %985 = vrot.lane.b32.xlu0 %v856, 16
        %v986 = vpop.permute.xlu0 %985
        %987 = vrot.lane.b32.xlu0 %v859, 16
        %v988 = vpop.permute.xlu0 %987
        %989 = vrot.lane.b32.xlu0 %v865, 16
        %v990 = vpop.permute.xlu0 %989
        %991 = vrot.lane.b32.xlu0 %v868, 16
        %v992 = vpop.permute.xlu0 %991
        %993 = vrot.lane.b32.xlu0 %v874, 16
        %v994 = vpop.permute.xlu0 %993
        %995 = vrot.lane.b32.xlu0 %v877, 16
        %v996 = vpop.permute.xlu0 %995
        %997 = vrot.lane.b32.xlu0 %v883, 16
        %v998 = vpop.permute.xlu0 %997
        %999 = vrot.lane.b32.xlu0 %v886, 16
        %v1000 = vpop.permute.xlu0 %999
        %1001 = vrot.lane.b32.xlu0 %v892, 16
        %v1002 = vpop.permute.xlu0 %1001
        %1003 = vrot.lane.b32.xlu0 %v895, 16
        %v1004 = vpop.permute.xlu0 %1003
        %1005 = vrot.lane.b32.xlu0 %v901, 16
        %v1006 = vpop.permute.xlu0 %1005
        %1007 = vrot.lane.b32.xlu0 %v904, 16
        %v1008 = vpop.permute.xlu0 %1007
        %1009 = vrot.lane.b32.xlu0 %v910, 16
        %v1010 = vpop.permute.xlu0 %1009
        %1011 = vrot.lane.b32.xlu0 %v913, 16
        %v1012 = vpop.permute.xlu0 %1011
        %1013 = vrot.lane.b32.xlu0 %v919, 16
        %v1014 = vpop.permute.xlu0 %1013
        %1015 = vrot.lane.b32.xlu0 %v922, 16
        %v1016 = vpop.permute.xlu0 %1015
        %1017 = vrot.lane.b32.xlu0 %v928, 16
        %v1018 = vpop.permute.xlu0 %1017
        %1019 = vrot.lane.b32.xlu0 %v931, 16
        %v1020 = vpop.permute.xlu0 %1019
        %1021 = vrot.lane.b32.xlu0 %v937, 16
        %v1022 = vpop.permute.xlu0 %1021
        %1023 = vrot.lane.b32.xlu0 %v940, 16
        %v1024 = vpop.permute.xlu0 %1023
        %1025 = vrot.lane.b32.xlu0 %v946, 16
        %v1026 = vpop.permute.xlu0 %1025
        %1027 = vrot.lane.b32.xlu0 %v949, 16
        %v1028 = vpop.permute.xlu0 %1027
        %1029 = vrot.lane.b32.xlu0 %v955, 16
        %v1030 = vpop.permute.xlu0 %1029
        %1031 = vrot.lane.b32.xlu0 %v958, 16
        %v1032 = vpop.permute.xlu0 %1031
        %1033 = vrot.lane.b32.xlu0 %v964, 16
        %v1034 = vpop.permute.xlu0 %1033
        %1035 = vrot.lane.b32.xlu0 %v967, 16
        %v1036 = vpop.permute.xlu0 %1035
        %1037 = vrot.lane.b32.xlu0 %v973, 16
        %v1038 = vpop.permute.xlu0 %1037
        %1039 = vrot.lane.b32.xlu0 %v976, 16
        %v1040 = vpop.permute.xlu0 %1039
        %vm1073 = vcmask 191616
        %1074 = vst.msk [vmem:[%s176] sm:$0xf] %vm1073, %v978
        %vm1075 = vcmask 191616
        %vm1076 = vmand %vm1075, %vm830
        %v1077 = vld [vmem:[%s176 + $0x4] sm:$0xf]
        %v1078 = vsel %vm1076, %v980, %v1077
        %1079 = vst [vmem:[%s176 + $0x4] sm:$0xf] %v1078
        %1080 = vst.msk [vmem:[%s176 + $0x8] sm:$0xf] %vm1073, %v982
        %v1081 = vld [vmem:[%s176 + $0xc] sm:$0xf]
        %v1082 = vsel %vm1076, %v984, %v1081
        %1083 = vst [vmem:[%s176 + $0xc] sm:$0xf] %v1082
        %1084 = vst.msk [vmem:[%s176 + $0x10] sm:$0xf] %vm1073, %v986
        %v1085 = vld [vmem:[%s176 + $0x14] sm:$0xf]
        %v1086 = vsel %vm1076, %v988, %v1085
        %1087 = vst [vmem:[%s176 + $0x14] sm:$0xf] %v1086
        %1088 = vst.msk [vmem:[%s176 + $0x18] sm:$0xf] %vm1073, %v990
        %v1089 = vld [vmem:[%s176 + $0x1c] sm:$0xf]
        %v1090 = vsel %vm1076, %v992, %v1089
        %1091 = vst [vmem:[%s176 + $0x1c] sm:$0xf] %v1090
        %1092 = vst.msk [vmem:[%s176 + $0x20] sm:$0xf] %vm1073, %v994
        %v1093 = vld [vmem:[%s176 + $0x24] sm:$0xf]
        %v1094 = vsel %vm1076, %v996, %v1093
        %1095 = vst [vmem:[%s176 + $0x24] sm:$0xf] %v1094
        %1096 = vst.msk [vmem:[%s176 + $0x28] sm:$0xf] %vm1073, %v998
        %v1097 = vld [vmem:[%s176 + $0x2c] sm:$0xf]
        %v1098 = vsel %vm1076, %v1000, %v1097
        %1099 = vst [vmem:[%s176 + $0x2c] sm:$0xf] %v1098
        %1100 = vst.msk [vmem:[%s176 + $0x30] sm:$0xf] %vm1073, %v1002
        %v1101 = vld [vmem:[%s176 + $0x34] sm:$0xf]
        %v1102 = vsel %vm1076, %v1004, %v1101
        %1103 = vst [vmem:[%s176 + $0x34] sm:$0xf] %v1102
        %1104 = vst.msk [vmem:[%s176 + $0x38] sm:$0xf] %vm1073, %v1006
        %v1105 = vld [vmem:[%s176 + $0x3c] sm:$0xf]
        %v1106 = vsel %vm1076, %v1008, %v1105
        %1107 = vst [vmem:[%s176 + $0x3c] sm:$0xf] %v1106
        %1108 = vst.msk [vmem:[%s176 + $0x40] sm:$0xf] %vm1073, %v1010
        %v1109 = vld [vmem:[%s176 + $0x44] sm:$0xf]
        %v1110 = vsel %vm1076, %v1012, %v1109
        %1111 = vst [vmem:[%s176 + $0x44] sm:$0xf] %v1110
        %1112 = vst.msk [vmem:[%s176 + $0x48] sm:$0xf] %vm1073, %v1014
        %v1113 = vld [vmem:[%s176 + $0x4c] sm:$0xf]
        %v1114 = vsel %vm1076, %v1016, %v1113
        %1115 = vst [vmem:[%s176 + $0x4c] sm:$0xf] %v1114
        %1116 = vst.msk [vmem:[%s176 + $0x50] sm:$0xf] %vm1073, %v1018
        %v1117 = vld [vmem:[%s176 + $0x54] sm:$0xf]
        %v1118 = vsel %vm1076, %v1020, %v1117
        %1119 = vst [vmem:[%s176 + $0x54] sm:$0xf] %v1118
        %1120 = vst.msk [vmem:[%s176 + $0x58] sm:$0xf] %vm1073, %v1022
        %v1121 = vld [vmem:[%s176 + $0x5c] sm:$0xf]
        %v1122 = vsel %vm1076, %v1024, %v1121
        %1123 = vst [vmem:[%s176 + $0x5c] sm:$0xf] %v1122
        %1124 = vst.msk [vmem:[%s176 + $0x60] sm:$0xf] %vm1073, %v1026
        %v1125 = vld [vmem:[%s176 + $0x64] sm:$0xf]
        %v1126 = vsel %vm1076, %v1028, %v1125
        %1127 = vst [vmem:[%s176 + $0x64] sm:$0xf] %v1126
        %1128 = vst.msk [vmem:[%s176 + $0x68] sm:$0xf] %vm1073, %v1030
        %v1129 = vld [vmem:[%s176 + $0x6c] sm:$0xf]
        %v1130 = vsel %vm1076, %v1032, %v1129
        %1131 = vst [vmem:[%s176 + $0x6c] sm:$0xf] %v1130
        %1132 = vst.msk [vmem:[%s176 + $0x70] sm:$0xf] %vm1073, %v1034
        %v1133 = vld [vmem:[%s176 + $0x74] sm:$0xf]
        %v1134 = vsel %vm1076, %v1036, %v1133
        %1135 = vst [vmem:[%s176 + $0x74] sm:$0xf] %v1134
        %1136 = vst.msk [vmem:[%s176 + $0x78] sm:$0xf] %vm1073, %v1038
        %v1137 = vld [vmem:[%s176 + $0x7c] sm:$0xf]
        %v1138 = vsel %vm1076, %v1040, %v1137
        %1139 = vst [vmem:[%s176 + $0x7c] sm:$0xf] %v1138
        %v1140 = vld [vmem:[%s2] sm:$0x1]
        %v1141 = vld [vmem:[#allocation2] sm:$0xf]
        %v1142 = vld [vmem:[#allocation2 + $0x4] sm:$0xf]
        %v1143 = vld [vmem:[#allocation2 + $0x8] sm:$0xf]
        %v1144 = vld [vmem:[#allocation2 + $0xc] sm:$0xf]
        %v1145 = vld [vmem:[#allocation2 + $0x10] sm:$0xf]
        %v1146 = vld [vmem:[#allocation2 + $0x14] sm:$0xf]
        %v1147 = vld [vmem:[#allocation2 + $0x18] sm:$0xf]
        %v1148 = vld [vmem:[#allocation2 + $0x1c] sm:$0xf]
        %v1149 = vld [vmem:[#allocation2 + $0x20] sm:$0xf]
        %v1150 = vld [vmem:[#allocation2 + $0x24] sm:$0xf]
        %v1151 = vld [vmem:[#allocation2 + $0x28] sm:$0xf]
        %v1152 = vld [vmem:[#allocation2 + $0x2c] sm:$0xf]
        %v1153 = vld [vmem:[#allocation2 + $0x30] sm:$0xf]
        %v1154 = vld [vmem:[#allocation2 + $0x34] sm:$0xf]
        %v1155 = vld [vmem:[#allocation2 + $0x38] sm:$0xf]
        %v1156 = vld [vmem:[#allocation2 + $0x3c] sm:$0xf]
        %v1157 = vld [vmem:[#allocation2 + $0x40] sm:$0xf]
        %v1158 = vld [vmem:[#allocation2 + $0x44] sm:$0xf]
        %v1159 = vld [vmem:[#allocation2 + $0x48] sm:$0xf]
        %v1160 = vld [vmem:[#allocation2 + $0x4c] sm:$0xf]
        %v1161 = vld [vmem:[#allocation2 + $0x50] sm:$0xf]
        %v1162 = vld [vmem:[#allocation2 + $0x54] sm:$0xf]
        %v1163 = vld [vmem:[#allocation2 + $0x58] sm:$0xf]
        %v1164 = vld [vmem:[#allocation2 + $0x5c] sm:$0xf]
        %v1165 = vld [vmem:[#allocation2 + $0x60] sm:$0xf]
        %v1166 = vld [vmem:[#allocation2 + $0x64] sm:$0xf]
        %v1167 = vld [vmem:[#allocation2 + $0x68] sm:$0xf]
        %v1168 = vld [vmem:[#allocation2 + $0x6c] sm:$0xf]
        %v1169 = vld [vmem:[#allocation2 + $0x70] sm:$0xf]
        %v1170 = vld [vmem:[#allocation2 + $0x74] sm:$0xf]
        %v1171 = vld [vmem:[#allocation2 + $0x78] sm:$0xf]
        %v1172 = vld [vmem:[#allocation2 + $0x7c] sm:$0xf]
        %v1173 = vld [vmem:[%s1] sm:$0xf]
        %v1174 = vld [vmem:[%s1 + $0x4] sm:$0xf]
        %v1175 = vld [vmem:[%s1 + $0x8] sm:$0xf]
        %v1176 = vld [vmem:[%s176] sm:$0xf]
        %v1177 = vld [vmem:[%s176 + $0x4] sm:$0xf]
        %v1178 = vld [vmem:[%s176 + $0x8] sm:$0xf]
        %v1179 = vld [vmem:[%s176 + $0xc] sm:$0xf]
        %v1180 = vld [vmem:[%s176 + $0x10] sm:$0xf]
        %v1181 = vld [vmem:[%s176 + $0x14] sm:$0xf]
        %v1182 = vld [vmem:[%s176 + $0x18] sm:$0xf]
        %v1183 = vld [vmem:[%s176 + $0x1c] sm:$0xf]
        %v1184 = vld [vmem:[%s176 + $0x20] sm:$0xf]
        %v1185 = vld [vmem:[%s176 + $0x24] sm:$0xf]
        %v1186 = vld [vmem:[%s176 + $0x28] sm:$0xf]
        %v1187 = vld [vmem:[%s176 + $0x2c] sm:$0xf]
        %v1188 = vld [vmem:[%s176 + $0x30] sm:$0xf]
        %v1189 = vld [vmem:[%s176 + $0x34] sm:$0xf]
        %v1190 = vld [vmem:[%s176 + $0x38] sm:$0xf]
        %v1191 = vld [vmem:[%s176 + $0x3c] sm:$0xf]
        %v1192 = vld [vmem:[%s176 + $0x40] sm:$0xf]
        %v1193 = vld [vmem:[%s176 + $0x44] sm:$0xf]
        %v1194 = vld [vmem:[%s176 + $0x48] sm:$0xf]
        %v1195 = vld [vmem:[%s176 + $0x4c] sm:$0xf]
        %v1196 = vld [vmem:[%s176 + $0x50] sm:$0xf]
        %v1197 = vld [vmem:[%s176 + $0x54] sm:$0xf]
        %v1198 = vld [vmem:[%s176 + $0x58] sm:$0xf]
        %v1199 = vld [vmem:[%s176 + $0x5c] sm:$0xf]
        %v1200 = vld [vmem:[%s176 + $0x60] sm:$0xf]
        %v1201 = vld [vmem:[%s176 + $0x64] sm:$0xf]
        %v1202 = vld [vmem:[%s176 + $0x68] sm:$0xf]
        %v1203 = vld [vmem:[%s176 + $0x6c] sm:$0xf]
        %v1204 = vld [vmem:[%s176 + $0x70] sm:$0xf]
        %v1205 = vld [vmem:[%s176 + $0x74] sm:$0xf]
        %v1206 = vld [vmem:[%s176 + $0x78] sm:$0xf]
        %v1207 = vld [vmem:[%s176 + $0x7c] sm:$0xf]
        %s1208 = scalar_lea.vmem %s1, 12
        %v1209 = vld [vmem:[%s1208] sm:$0xf]
        %v1210 = vld [vmem:[%s1208 + $0x4] sm:$0xf]
        %v1211 = vld [vmem:[%s1208 + $0x8] sm:$0xf]
        %v1244 = vunpack.c.l.b16 %v1176
        %v1245 = vunpack.c.l.b16 %v1177
        %v1246 = vunpack.c.l.b16 %v1178
        %v1247 = vunpack.c.l.b16 %v1179
        %v1248 = vunpack.c.l.b16 %v1180
        %v1249 = vunpack.c.l.b16 %v1181
        %v1250 = vunpack.c.l.b16 %v1182
        %v1251 = vunpack.c.l.b16 %v1183
        %v1252 = vunpack.c.l.b16 %v1184
        %v1253 = vunpack.c.l.b16 %v1185
        %v1254 = vunpack.c.l.b16 %v1186
        %v1255 = vunpack.c.l.b16 %v1187
        %v1256 = vunpack.c.l.b16 %v1188
        %v1257 = vunpack.c.l.b16 %v1189
        %v1258 = vunpack.c.l.b16 %v1190
        %v1259 = vunpack.c.l.b16 %v1191
        %v1260 = vunpack.c.l.b16 %v1192
        %v1261 = vunpack.c.l.b16 %v1193
        %v1262 = vunpack.c.l.b16 %v1194
        %v1263 = vunpack.c.l.b16 %v1195
        %v1264 = vunpack.c.l.b16 %v1196
        %v1265 = vunpack.c.l.b16 %v1197
        %v1266 = vunpack.c.l.b16 %v1198
        %v1267 = vunpack.c.l.b16 %v1199
        %v1268 = vunpack.c.l.b16 %v1200
        %v1269 = vunpack.c.l.b16 %v1201
        %v1270 = vunpack.c.l.b16 %v1202
        %v1271 = vunpack.c.l.b16 %v1203
        %v1272 = vunpack.c.l.b16 %v1204
        %v1273 = vunpack.c.l.b16 %v1205
        %v1274 = vunpack.c.l.b16 %v1206
        %v1275 = vunpack.c.l.b16 %v1207
        %v1276 = vpack.c.b16 %v1245, %v1244
        %v1277 = vpack.c.b16 %v1247, %v1246
        %v1278 = vpack.c.b16 %v1249, %v1248
        %v1279 = vpack.c.b16 %v1251, %v1250
        %v1280 = vpack.c.b16 %v1253, %v1252
        %v1281 = vpack.c.b16 %v1255, %v1254
        %v1282 = vpack.c.b16 %v1257, %v1256
        %v1283 = vpack.c.b16 %v1259, %v1258
        %v1284 = vpack.c.b16 %v1261, %v1260
        %v1285 = vpack.c.b16 %v1263, %v1262
        %v1286 = vpack.c.b16 %v1265, %v1264
        %v1287 = vpack.c.b16 %v1267, %v1266
        %v1288 = vpack.c.b16 %v1269, %v1268
        %v1289 = vpack.c.b16 %v1271, %v1270
        %v1290 = vpack.c.b16 %v1273, %v1272
        %v1291 = vpack.c.b16 %v1275, %v1274
        %v1295 = vunpack.c.l.b16 %v1209
        %v1296 = vunpack.c.l.b16 %v1210
        %v1297 = vunpack.c.l.b16 %v1211
        %v1298 = vpack.c.b16 %v1296, %v1295
        %v1299 = vpack.c.b16 %v1297, %v1297
        %vm1301 = vcmask 195584
        %v1303 = vsel %vm1301, %v1276, 0
        %v1306 = vsel %vm1301, %v1277, 0
        %v1309 = vsel %vm1301, %v1278, 0
        %v1312 = vsel %vm1301, %v1279, 0
        %v1315 = vsel %vm1301, %v1280, 0
        %v1318 = vsel %vm1301, %v1281, 0
        %v1321 = vsel %vm1301, %v1282, 0
        %v1324 = vsel %vm1301, %v1283, 0
        %v1327 = vsel %vm1301, %v1284, 0
        %v1330 = vsel %vm1301, %v1285, 0
        %v1333 = vsel %vm1301, %v1286, 0
        %v1336 = vsel %vm1301, %v1287, 0
        %v1339 = vsel %vm1301, %v1288, 0
        %v1342 = vsel %vm1301, %v1289, 0
        %v1345 = vsel %vm1301, %v1290, 0
        %v1348 = vsel %vm1301, %v1291, 0
        %vm1350 = vcmask 1043456
        %v1352 = vsel %vm1350, %v1299, 0
        %1354 = vmatprep.subr.bf16.mxu0 0
        %1355 = vmatpush1.bf16.msra.mxu0 0
        %1356 = vmatprep.subr.bf16.mxu0 0
        %1357 = vmatpush1.bf16.msra.mxu0 0
        %1358 = vmatprep.subr.bf16.mxu0 0
        %1359 = vmatpush1.bf16.msra.mxu0 0
        %1360 = vmatprep.subr.bf16.mxu0 0
        %1361 = vmatpush1.bf16.msra.mxu0 0
        %1362 = vmatprep.subr.bf16.mxu0 0
        %1363 = vmatpush1.bf16.msra.mxu0 0
        %1364 = vmatprep.subr.bf16.mxu0 0
        %1365 = vmatpush1.bf16.msra.mxu0 0
        %1366 = vmatprep.subr.bf16.mxu0 0
        %1367 = vmatpush1.bf16.msra.mxu0 %v1352
        %1368 = vmatprep.subr.bf16.mxu0 0
        %1369 = vmatpush1.bf16.msra.mxu0 %v1298
        %1370 = vmatprep.subr.bf16.mxu0 0
        %1371 = vmatpush2.bf16.msra.mxu0 0
        %1372 = vmatprep.subr.bf16.mxu0 0
        %1373 = vmatpush2.bf16.msra.mxu0 0
        %1374 = vmatprep.subr.bf16.mxu0 0
        %1375 = vmatpush2.bf16.msra.mxu0 0
        %1376 = vmatprep.subr.bf16.mxu0 0
        %1377 = vmatpush2.bf16.msra.mxu0 0
        %1378 = vmatprep.subr.bf16.mxu0 0
        %1379 = vmatpush2.bf16.msra.mxu0 0
        %1380 = vmatprep.subr.bf16.mxu0 0
        %1381 = vmatpush2.bf16.msra.mxu0 0
        %1382 = vmatprep.subr.bf16.mxu0 0
        %1383 = vmatpush2.bf16.msra.mxu0 0
        %1384 = vmatprep.subr.bf16.mxu0 0
        %1385 = vmatpush2.bf16.msra.mxu0 0
        %1386 = vmatprep.mubr.bf16.mxu0 0
        %1387 = vmatmul.mubr.bf16.gmra.mxu0 %v1303
        %v1388 = vpop.f32.mrf.mxu0
        %v1389 = vadd.f32 0.0, %v1388
        %v1390 = vpop.f32.mrf.mxu0
        %v1391 = vpop.f32.mrf.mxu0
        %v1392 = vadd.f32 0.0, %v1391
        %v1393 = vpop.f32.mrf.mxu0
        %1394 = vmatprep.mubr.bf16.mxu0 0
        %1395 = vmatmul.mubr.bf16.gmra.mxu0 %v1306
        %v1396 = vpop.f32.mrf.mxu0
        %v1397 = vadd.f32 0.0, %v1396
        %v1398 = vpop.f32.mrf.mxu0
        %v1399 = vpop.f32.mrf.mxu0
        %v1400 = vadd.f32 0.0, %v1399
        %v1401 = vpop.f32.mrf.mxu0
        %1402 = vmatprep.mubr.bf16.mxu0 0
        %1403 = vmatmul.mubr.bf16.gmra.mxu0 %v1309
        %v1404 = vpop.f32.mrf.mxu0
        %v1405 = vadd.f32 0.0, %v1404
        %v1406 = vpop.f32.mrf.mxu0
        %v1407 = vpop.f32.mrf.mxu0
        %v1408 = vadd.f32 0.0, %v1407
        %v1409 = vpop.f32.mrf.mxu0
        %1410 = vmatprep.mubr.bf16.mxu0 0
        %1411 = vmatmul.mubr.bf16.gmra.mxu0 %v1312
        %v1412 = vpop.f32.mrf.mxu0
        %v1413 = vadd.f32 0.0, %v1412
        %v1414 = vpop.f32.mrf.mxu0
        %v1415 = vpop.f32.mrf.mxu0
        %v1416 = vadd.f32 0.0, %v1415
        %v1417 = vpop.f32.mrf.mxu0
        %1418 = vmatprep.mubr.bf16.mxu0 0
        %1419 = vmatmul.mubr.bf16.gmra.mxu0 %v1315
        %v1420 = vpop.f32.mrf.mxu0
        %v1421 = vadd.f32 0.0, %v1420
        %v1422 = vpop.f32.mrf.mxu0
        %v1423 = vpop.f32.mrf.mxu0
        %v1424 = vadd.f32 0.0, %v1423
        %v1425 = vpop.f32.mrf.mxu0
        %1426 = vmatprep.mubr.bf16.mxu0 0
        %1427 = vmatmul.mubr.bf16.gmra.mxu0 %v1318
        %v1428 = vpop.f32.mrf.mxu0
        %v1429 = vadd.f32 0.0, %v1428
        %v1430 = vpop.f32.mrf.mxu0
        %v1431 = vpop.f32.mrf.mxu0
        %v1432 = vadd.f32 0.0, %v1431
        %v1433 = vpop.f32.mrf.mxu0
        %1434 = vmatprep.mubr.bf16.mxu0 0
        %1435 = vmatmul.mubr.bf16.gmra.mxu0 %v1321
        %v1436 = vpop.f32.mrf.mxu0
        %v1437 = vadd.f32 0.0, %v1436
        %v1438 = vpop.f32.mrf.mxu0
        %v1439 = vpop.f32.mrf.mxu0
        %v1440 = vadd.f32 0.0, %v1439
        %v1441 = vpop.f32.mrf.mxu0
        %1442 = vmatprep.mubr.bf16.mxu0 0
        %1443 = vmatmul.mubr.bf16.gmra.mxu0 %v1324
        %v1444 = vpop.f32.mrf.mxu0
        %v1445 = vadd.f32 0.0, %v1444
        %v1446 = vpop.f32.mrf.mxu0
        %v1447 = vpop.f32.mrf.mxu0
        %v1448 = vadd.f32 0.0, %v1447
        %v1449 = vpop.f32.mrf.mxu0
        %1450 = vmatprep.mubr.bf16.mxu0 0
        %1451 = vmatmul.mubr.bf16.gmra.mxu0 %v1327
        %v1452 = vpop.f32.mrf.mxu0
        %v1453 = vadd.f32 0.0, %v1452
        %v1454 = vpop.f32.mrf.mxu0
        %v1455 = vpop.f32.mrf.mxu0
        %v1456 = vadd.f32 0.0, %v1455
        %v1457 = vpop.f32.mrf.mxu0
        %1458 = vmatprep.mubr.bf16.mxu0 0
        %1459 = vmatmul.mubr.bf16.gmra.mxu0 %v1330
        %v1460 = vpop.f32.mrf.mxu0
        %v1461 = vadd.f32 0.0, %v1460
        %v1462 = vpop.f32.mrf.mxu0
        %v1463 = vpop.f32.mrf.mxu0
        %v1464 = vadd.f32 0.0, %v1463
        %v1465 = vpop.f32.mrf.mxu0
        %1466 = vmatprep.mubr.bf16.mxu0 0
        %1467 = vmatmul.mubr.bf16.gmra.mxu0 %v1333
        %v1468 = vpop.f32.mrf.mxu0
        %v1469 = vadd.f32 0.0, %v1468
        %v1470 = vpop.f32.mrf.mxu0
        %v1471 = vpop.f32.mrf.mxu0
        %v1472 = vadd.f32 0.0, %v1471
        %v1473 = vpop.f32.mrf.mxu0
        %1474 = vmatprep.mubr.bf16.mxu0 0
        %1475 = vmatmul.mubr.bf16.gmra.mxu0 %v1336
        %v1476 = vpop.f32.mrf.mxu0
        %v1477 = vadd.f32 0.0, %v1476
        %v1478 = vpop.f32.mrf.mxu0
        %v1479 = vpop.f32.mrf.mxu0
        %v1480 = vadd.f32 0.0, %v1479
        %v1481 = vpop.f32.mrf.mxu0
        %1482 = vmatprep.mubr.bf16.mxu0 0
        %1483 = vmatmul.mubr.bf16.gmra.mxu0 %v1339
        %v1484 = vpop.f32.mrf.mxu0
        %v1485 = vadd.f32 0.0, %v1484
        %v1486 = vpop.f32.mrf.mxu0
        %v1487 = vpop.f32.mrf.mxu0
        %v1488 = vadd.f32 0.0, %v1487
        %v1489 = vpop.f32.mrf.mxu0
        %1490 = vmatprep.mubr.bf16.mxu0 0
        %1491 = vmatmul.mubr.bf16.gmra.mxu0 %v1342
        %v1492 = vpop.f32.mrf.mxu0
        %v1493 = vadd.f32 0.0, %v1492
        %v1494 = vpop.f32.mrf.mxu0
        %v1495 = vpop.f32.mrf.mxu0
        %v1496 = vadd.f32 0.0, %v1495
        %v1497 = vpop.f32.mrf.mxu0
        %1498 = vmatprep.mubr.bf16.mxu0 0
        %1499 = vmatmul.mubr.bf16.gmra.mxu0 %v1345
        %v1500 = vpop.f32.mrf.mxu0
        %v1501 = vadd.f32 0.0, %v1500
        %v1502 = vpop.f32.mrf.mxu0
        %v1503 = vpop.f32.mrf.mxu0
        %v1504 = vadd.f32 0.0, %v1503
        %v1505 = vpop.f32.mrf.mxu0
        %1506 = vmatprep.mubr.bf16.mxu0 0
        %1507 = vmatmul.mubr.bf16.gmra.mxu0 %v1348
        %v1508 = vpop.f32.mrf.mxu0
        %v1509 = vadd.f32 0.0, %v1508
        %v1510 = vpop.f32.mrf.mxu0
        %v1511 = vpop.f32.mrf.mxu0
        %v1512 = vadd.f32 0.0, %v1511
        %v1513 = vpop.f32.mrf.mxu0
        %1514 = vdwg.mxu0
        %v1547 = vunpack.c.l.b16 %v1141
        %v1548 = vunpack.c.l.b16 %v1142
        %v1549 = vunpack.c.l.b16 %v1143
        %v1550 = vunpack.c.l.b16 %v1144
        %v1551 = vunpack.c.l.b16 %v1145
        %v1552 = vunpack.c.l.b16 %v1146
        %v1553 = vunpack.c.l.b16 %v1147
        %v1554 = vunpack.c.l.b16 %v1148
        %v1555 = vunpack.c.l.b16 %v1149
        %v1556 = vunpack.c.l.b16 %v1150
        %v1557 = vunpack.c.l.b16 %v1151
        %v1558 = vunpack.c.l.b16 %v1152
        %v1559 = vunpack.c.l.b16 %v1153
        %v1560 = vunpack.c.l.b16 %v1154
        %v1561 = vunpack.c.l.b16 %v1155
        %v1562 = vunpack.c.l.b16 %v1156
        %v1563 = vunpack.c.l.b16 %v1157
        %v1564 = vunpack.c.l.b16 %v1158
        %v1565 = vunpack.c.l.b16 %v1159
        %v1566 = vunpack.c.l.b16 %v1160
        %v1567 = vunpack.c.l.b16 %v1161
        %v1568 = vunpack.c.l.b16 %v1162
        %v1569 = vunpack.c.l.b16 %v1163
        %v1570 = vunpack.c.l.b16 %v1164
        %v1571 = vunpack.c.l.b16 %v1165
        %v1572 = vunpack.c.l.b16 %v1166
        %v1573 = vunpack.c.l.b16 %v1167
        %v1574 = vunpack.c.l.b16 %v1168
        %v1575 = vunpack.c.l.b16 %v1169
        %v1576 = vunpack.c.l.b16 %v1170
        %v1577 = vunpack.c.l.b16 %v1171
        %v1578 = vunpack.c.l.b16 %v1172
        %v1579 = vpack.c.b16 %v1548, %v1547
        %v1580 = vpack.c.b16 %v1550, %v1549
        %v1581 = vpack.c.b16 %v1552, %v1551
        %v1582 = vpack.c.b16 %v1554, %v1553
        %v1583 = vpack.c.b16 %v1556, %v1555
        %v1584 = vpack.c.b16 %v1558, %v1557
        %v1585 = vpack.c.b16 %v1560, %v1559
        %v1586 = vpack.c.b16 %v1562, %v1561
        %v1587 = vpack.c.b16 %v1564, %v1563
        %v1588 = vpack.c.b16 %v1566, %v1565
        %v1589 = vpack.c.b16 %v1568, %v1567
        %v1590 = vpack.c.b16 %v1570, %v1569
        %v1591 = vpack.c.b16 %v1572, %v1571
        %v1592 = vpack.c.b16 %v1574, %v1573
        %v1593 = vpack.c.b16 %v1576, %v1575
        %v1594 = vpack.c.b16 %v1578, %v1577
        %v1598 = vunpack.c.l.b16 %v1173
        %v1599 = vunpack.c.l.b16 %v1174
        %v1600 = vunpack.c.l.b16 %v1175
        %v1601 = vpack.c.b16 %v1599, %v1598
        %v1602 = vpack.c.b16 %v1600, %v1600
        %v1605 = vsel %vm1301, %v1579, 0
        %v1608 = vsel %vm1301, %v1580, 0
        %v1611 = vsel %vm1301, %v1581, 0
        %v1614 = vsel %vm1301, %v1582, 0
        %v1617 = vsel %vm1301, %v1583, 0
        %v1620 = vsel %vm1301, %v1584, 0
        %v1623 = vsel %vm1301, %v1585, 0
        %v1626 = vsel %vm1301, %v1586, 0
        %v1629 = vsel %vm1301, %v1587, 0
        %v1632 = vsel %vm1301, %v1588, 0
        %v1635 = vsel %vm1301, %v1589, 0
        %v1638 = vsel %vm1301, %v1590, 0
        %v1641 = vsel %vm1301, %v1591, 0
        %v1644 = vsel %vm1301, %v1592, 0
        %v1647 = vsel %vm1301, %v1593, 0
        %v1650 = vsel %vm1301, %v1594, 0
        %v1653 = vsel %vm1350, %v1602, 0
        %1655 = vmatprep.subr.bf16.mxu0 0
        %1656 = vmatpush1.bf16.msra.mxu0 0
        %1657 = vmatprep.subr.bf16.mxu0 0
        %1658 = vmatpush1.bf16.msra.mxu0 0
        %1659 = vmatprep.subr.bf16.mxu0 0
        %1660 = vmatpush1.bf16.msra.mxu0 0
        %1661 = vmatprep.subr.bf16.mxu0 0
        %1662 = vmatpush1.bf16.msra.mxu0 0
        %1663 = vmatprep.subr.bf16.mxu0 0
        %1664 = vmatpush1.bf16.msra.mxu0 0
        %1665 = vmatprep.subr.bf16.mxu0 0
        %1666 = vmatpush1.bf16.msra.mxu0 0
        %1667 = vmatprep.subr.bf16.mxu0 0
        %1668 = vmatpush1.bf16.msra.mxu0 %v1653
        %1669 = vmatprep.subr.bf16.mxu0 0
        %1670 = vmatpush1.bf16.msra.mxu0 %v1601
        %1671 = vmatprep.subr.bf16.mxu0 0
        %1672 = vmatpush2.bf16.msra.mxu0 0
        %1673 = vmatprep.subr.bf16.mxu0 0
        %1674 = vmatpush2.bf16.msra.mxu0 0
        %1675 = vmatprep.subr.bf16.mxu0 0
        %1676 = vmatpush2.bf16.msra.mxu0 0
        %1677 = vmatprep.subr.bf16.mxu0 0
        %1678 = vmatpush2.bf16.msra.mxu0 0
        %1679 = vmatprep.subr.bf16.mxu0 0
        %1680 = vmatpush2.bf16.msra.mxu0 0
        %1681 = vmatprep.subr.bf16.mxu0 0
        %1682 = vmatpush2.bf16.msra.mxu0 0
        %1683 = vmatprep.subr.bf16.mxu0 0
        %1684 = vmatpush2.bf16.msra.mxu0 0
        %1685 = vmatprep.subr.bf16.mxu0 0
        %1686 = vmatpush2.bf16.msra.mxu0 0
        %1687 = vmatprep.mubr.bf16.mxu0 0
        %1688 = vmatmul.mubr.bf16.gmra.mxu0 %v1605
        %v1689 = vpop.f32.mrf.mxu0
        %v1690 = vadd.f32 %v1389, %v1689
        %v1691 = vpop.f32.mrf.mxu0
        %v1692 = vpop.f32.mrf.mxu0
        %v1693 = vadd.f32 %v1392, %v1692
        %v1694 = vpop.f32.mrf.mxu0
        %1695 = vmatprep.mubr.bf16.mxu0 0
        %1696 = vmatmul.mubr.bf16.gmra.mxu0 %v1608
        %v1697 = vpop.f32.mrf.mxu0
        %v1698 = vadd.f32 %v1397, %v1697
        %v1699 = vpop.f32.mrf.mxu0
        %v1700 = vpop.f32.mrf.mxu0
        %v1701 = vadd.f32 %v1400, %v1700
        %v1702 = vpop.f32.mrf.mxu0
        %1703 = vmatprep.mubr.bf16.mxu0 0
        %1704 = vmatmul.mubr.bf16.gmra.mxu0 %v1611
        %v1705 = vpop.f32.mrf.mxu0
        %v1706 = vadd.f32 %v1405, %v1705
        %v1707 = vpop.f32.mrf.mxu0
        %v1708 = vpop.f32.mrf.mxu0
        %v1709 = vadd.f32 %v1408, %v1708
        %v1710 = vpop.f32.mrf.mxu0
        %1711 = vmatprep.mubr.bf16.mxu0 0
        %1712 = vmatmul.mubr.bf16.gmra.mxu0 %v1614
        %v1713 = vpop.f32.mrf.mxu0
        %v1714 = vadd.f32 %v1413, %v1713
        %v1715 = vpop.f32.mrf.mxu0
        %v1716 = vpop.f32.mrf.mxu0
        %v1717 = vadd.f32 %v1416, %v1716
        %v1718 = vpop.f32.mrf.mxu0
        %1719 = vmatprep.mubr.bf16.mxu0 0
        %1720 = vmatmul.mubr.bf16.gmra.mxu0 %v1617
        %v1721 = vpop.f32.mrf.mxu0
        %v1722 = vadd.f32 %v1421, %v1721
        %v1723 = vpop.f32.mrf.mxu0
        %v1724 = vpop.f32.mrf.mxu0
        %v1725 = vadd.f32 %v1424, %v1724
        %v1726 = vpop.f32.mrf.mxu0
        %1727 = vmatprep.mubr.bf16.mxu0 0
        %1728 = vmatmul.mubr.bf16.gmra.mxu0 %v1620
        %v1729 = vpop.f32.mrf.mxu0
        %v1730 = vadd.f32 %v1429, %v1729
        %v1731 = vpop.f32.mrf.mxu0
        %v1732 = vpop.f32.mrf.mxu0
        %v1733 = vadd.f32 %v1432, %v1732
        %v1734 = vpop.f32.mrf.mxu0
        %1735 = vmatprep.mubr.bf16.mxu0 0
        %1736 = vmatmul.mubr.bf16.gmra.mxu0 %v1623
        %v1737 = vpop.f32.mrf.mxu0
        %v1738 = vadd.f32 %v1437, %v1737
        %v1739 = vpop.f32.mrf.mxu0
        %v1740 = vpop.f32.mrf.mxu0
        %v1741 = vadd.f32 %v1440, %v1740
        %v1742 = vpop.f32.mrf.mxu0
        %1743 = vmatprep.mubr.bf16.mxu0 0
        %1744 = vmatmul.mubr.bf16.gmra.mxu0 %v1626
        %v1745 = vpop.f32.mrf.mxu0
        %v1746 = vadd.f32 %v1445, %v1745
        %v1747 = vpop.f32.mrf.mxu0
        %v1748 = vpop.f32.mrf.mxu0
        %v1749 = vadd.f32 %v1448, %v1748
        %v1750 = vpop.f32.mrf.mxu0
        %1751 = vmatprep.mubr.bf16.mxu0 0
        %1752 = vmatmul.mubr.bf16.gmra.mxu0 %v1629
        %v1753 = vpop.f32.mrf.mxu0
        %v1754 = vadd.f32 %v1453, %v1753
        %v1755 = vpop.f32.mrf.mxu0
        %v1756 = vpop.f32.mrf.mxu0
        %v1757 = vadd.f32 %v1456, %v1756
        %v1758 = vpop.f32.mrf.mxu0
        %1759 = vmatprep.mubr.bf16.mxu0 0
        %1760 = vmatmul.mubr.bf16.gmra.mxu0 %v1632
        %v1761 = vpop.f32.mrf.mxu0
        %v1762 = vadd.f32 %v1461, %v1761
        %v1763 = vpop.f32.mrf.mxu0
        %v1764 = vpop.f32.mrf.mxu0
        %v1765 = vadd.f32 %v1464, %v1764
        %v1766 = vpop.f32.mrf.mxu0
        %1767 = vmatprep.mubr.bf16.mxu0 0
        %1768 = vmatmul.mubr.bf16.gmra.mxu0 %v1635
        %v1769 = vpop.f32.mrf.mxu0
        %v1770 = vadd.f32 %v1469, %v1769
        %v1771 = vpop.f32.mrf.mxu0
        %v1772 = vpop.f32.mrf.mxu0
        %v1773 = vadd.f32 %v1472, %v1772
        %v1774 = vpop.f32.mrf.mxu0
        %1775 = vmatprep.mubr.bf16.mxu0 0
        %1776 = vmatmul.mubr.bf16.gmra.mxu0 %v1638
        %v1777 = vpop.f32.mrf.mxu0
        %v1778 = vadd.f32 %v1477, %v1777
        %v1779 = vpop.f32.mrf.mxu0
        %v1780 = vpop.f32.mrf.mxu0
        %v1781 = vadd.f32 %v1480, %v1780
        %v1782 = vpop.f32.mrf.mxu0
        %1783 = vmatprep.mubr.bf16.mxu0 0
        %1784 = vmatmul.mubr.bf16.gmra.mxu0 %v1641
        %v1785 = vpop.f32.mrf.mxu0
        %v1786 = vadd.f32 %v1485, %v1785
        %v1787 = vpop.f32.mrf.mxu0
        %v1788 = vpop.f32.mrf.mxu0
        %v1789 = vadd.f32 %v1488, %v1788
        %v1790 = vpop.f32.mrf.mxu0
        %1791 = vmatprep.mubr.bf16.mxu0 0
        %1792 = vmatmul.mubr.bf16.gmra.mxu0 %v1644
        %v1793 = vpop.f32.mrf.mxu0
        %v1794 = vadd.f32 %v1493, %v1793
        %v1795 = vpop.f32.mrf.mxu0
        %v1796 = vpop.f32.mrf.mxu0
        %v1797 = vadd.f32 %v1496, %v1796
        %v1798 = vpop.f32.mrf.mxu0
        %1799 = vmatprep.mubr.bf16.mxu0 0
        %1800 = vmatmul.mubr.bf16.gmra.mxu0 %v1647
        %v1801 = vpop.f32.mrf.mxu0
        %v1802 = vadd.f32 %v1501, %v1801
        %v1803 = vpop.f32.mrf.mxu0
        %v1804 = vpop.f32.mrf.mxu0
        %v1805 = vadd.f32 %v1504, %v1804
        %v1806 = vpop.f32.mrf.mxu0
        %1807 = vmatprep.mubr.bf16.mxu0 0
        %1808 = vmatmul.mubr.bf16.gmra.mxu0 %v1650
        %v1809 = vpop.f32.mrf.mxu0
        %v1810 = vadd.f32 %v1509, %v1809
        %v1811 = vpop.f32.mrf.mxu0
        %v1812 = vpop.f32.mrf.mxu0
        %v1813 = vadd.f32 %v1512, %v1812
        %v1814 = vpop.f32.mrf.mxu0
        %1815 = vdwg.mxu0
        %s1816 = scalar_lea.vmem [#allocation2], 16
        %v1817 = vld [vmem:[%s1816] sm:$0xf]
        %v1818 = vld [vmem:[%s1816 + $0x4] sm:$0xf]
        %v1819 = vld [vmem:[%s1816 + $0x8] sm:$0xf]
        %v1820 = vld [vmem:[%s1816 + $0xc] sm:$0xf]
        %v1821 = vld [vmem:[%s1816 + $0x10] sm:$0xf]
        %v1822 = vld [vmem:[%s1816 + $0x14] sm:$0xf]
        %v1823 = vld [vmem:[%s1816 + $0x18] sm:$0xf]
        %v1824 = vld [vmem:[%s1816 + $0x1c] sm:$0xf]
        %v1825 = vld [vmem:[%s1816 + $0x20] sm:$0xf]
        %v1826 = vld [vmem:[%s1816 + $0x24] sm:$0xf]
        %v1827 = vld [vmem:[%s1816 + $0x28] sm:$0xf]
        %v1828 = vld [vmem:[%s1816 + $0x2c] sm:$0xf]
        %v1829 = vld [vmem:[%s1816 + $0x30] sm:$0xf]
        %v1830 = vld [vmem:[%s1816 + $0x34] sm:$0xf]
        %v1831 = vld [vmem:[%s1816 + $0x38] sm:$0xf]
        %v1832 = vld [vmem:[%s1816 + $0x3c] sm:$0xf]
        %v1833 = vld [vmem:[%s1816 + $0x40] sm:$0xf]
        %v1834 = vld [vmem:[%s1816 + $0x44] sm:$0xf]
        %v1835 = vld [vmem:[%s1816 + $0x48] sm:$0xf]
        %v1836 = vld [vmem:[%s1816 + $0x4c] sm:$0xf]
        %v1837 = vld [vmem:[%s1816 + $0x50] sm:$0xf]
        %v1838 = vld [vmem:[%s1816 + $0x54] sm:$0xf]
        %v1839 = vld [vmem:[%s1816 + $0x58] sm:$0xf]
        %v1840 = vld [vmem:[%s1816 + $0x5c] sm:$0xf]
        %v1841 = vld [vmem:[%s1816 + $0x60] sm:$0xf]
        %v1842 = vld [vmem:[%s1816 + $0x64] sm:$0xf]
        %v1843 = vld [vmem:[%s1816 + $0x68] sm:$0xf]
        %v1844 = vld [vmem:[%s1816 + $0x6c] sm:$0xf]
        %v1845 = vld [vmem:[%s1816 + $0x70] sm:$0xf]
        %v1846 = vld [vmem:[%s1816 + $0x74] sm:$0xf]
        %v1847 = vld [vmem:[%s1816 + $0x78] sm:$0xf]
        %v1848 = vld [vmem:[%s1816 + $0x7c] sm:$0xf]
        %s1849 = scalar_lea.vmem %s1, 24
        %v1850 = vld [vmem:[%s1849] sm:$0xf]
        %v1851 = vld [vmem:[%s1849 + $0x4] sm:$0xf]
        %v1852 = vld [vmem:[%s1849 + $0x8] sm:$0xf]
        %v1885 = vunpack.c.l.b16 %v1817
        %v1886 = vunpack.c.l.b16 %v1818
        %v1887 = vunpack.c.l.b16 %v1819
        %v1888 = vunpack.c.l.b16 %v1820
        %v1889 = vunpack.c.l.b16 %v1821
        %v1890 = vunpack.c.l.b16 %v1822
        %v1891 = vunpack.c.l.b16 %v1823
        %v1892 = vunpack.c.l.b16 %v1824
        %v1893 = vunpack.c.l.b16 %v1825
        %v1894 = vunpack.c.l.b16 %v1826
        %v1895 = vunpack.c.l.b16 %v1827
        %v1896 = vunpack.c.l.b16 %v1828
        %v1897 = vunpack.c.l.b16 %v1829
        %v1898 = vunpack.c.l.b16 %v1830
        %v1899 = vunpack.c.l.b16 %v1831
        %v1900 = vunpack.c.l.b16 %v1832
        %v1901 = vunpack.c.l.b16 %v1833
        %v1902 = vunpack.c.l.b16 %v1834
        %v1903 = vunpack.c.l.b16 %v1835
        %v1904 = vunpack.c.l.b16 %v1836
        %v1905 = vunpack.c.l.b16 %v1837
        %v1906 = vunpack.c.l.b16 %v1838
        %v1907 = vunpack.c.l.b16 %v1839
        %v1908 = vunpack.c.l.b16 %v1840
        %v1909 = vunpack.c.l.b16 %v1841
        %v1910 = vunpack.c.l.b16 %v1842
        %v1911 = vunpack.c.l.b16 %v1843
        %v1912 = vunpack.c.l.b16 %v1844
        %v1913 = vunpack.c.l.b16 %v1845
        %v1914 = vunpack.c.l.b16 %v1846
        %v1915 = vunpack.c.l.b16 %v1847
        %v1916 = vunpack.c.l.b16 %v1848
        %v1917 = vpack.c.b16 %v1886, %v1885
        %v1918 = vpack.c.b16 %v1888, %v1887
        %v1919 = vpack.c.b16 %v1890, %v1889
        %v1920 = vpack.c.b16 %v1892, %v1891
        %v1921 = vpack.c.b16 %v1894, %v1893
        %v1922 = vpack.c.b16 %v1896, %v1895
        %v1923 = vpack.c.b16 %v1898, %v1897
        %v1924 = vpack.c.b16 %v1900, %v1899
        %v1925 = vpack.c.b16 %v1902, %v1901
        %v1926 = vpack.c.b16 %v1904, %v1903
        %v1927 = vpack.c.b16 %v1906, %v1905
        %v1928 = vpack.c.b16 %v1908, %v1907
        %v1929 = vpack.c.b16 %v1910, %v1909
        %v1930 = vpack.c.b16 %v1912, %v1911
        %v1931 = vpack.c.b16 %v1914, %v1913
        %v1932 = vpack.c.b16 %v1916, %v1915
        %v1936 = vunpack.c.l.b16 %v1850
        %v1937 = vunpack.c.l.b16 %v1851
        %v1938 = vunpack.c.l.b16 %v1852
        %v1939 = vpack.c.b16 %v1937, %v1936
        %v1940 = vpack.c.b16 %v1938, %v1938
        %v1943 = vsel %vm1301, %v1917, 0
        %v1946 = vsel %vm1301, %v1918, 0
        %v1949 = vsel %vm1301, %v1919, 0
        %v1952 = vsel %vm1301, %v1920, 0
        %v1955 = vsel %vm1301, %v1921, 0
        %v1958 = vsel %vm1301, %v1922, 0
        %v1961 = vsel %vm1301, %v1923, 0
        %v1964 = vsel %vm1301, %v1924, 0
        %v1967 = vsel %vm1301, %v1925, 0
        %v1970 = vsel %vm1301, %v1926, 0
        %v1973 = vsel %vm1301, %v1927, 0
        %v1976 = vsel %vm1301, %v1928, 0
        %v1979 = vsel %vm1301, %v1929, 0
        %v1982 = vsel %vm1301, %v1930, 0
        %v1985 = vsel %vm1301, %v1931, 0
        %v1988 = vsel %vm1301, %v1932, 0
        %v1991 = vsel %vm1350, %v1940, 0
        %1993 = vmatprep.subr.bf16.mxu0 0
        %1994 = vmatpush1.bf16.msra.mxu0 0
        %1995 = vmatprep.subr.bf16.mxu0 0
        %1996 = vmatpush1.bf16.msra.mxu0 0
        %1997 = vmatprep.subr.bf16.mxu0 0
        %1998 = vmatpush1.bf16.msra.mxu0 0
        %1999 = vmatprep.subr.bf16.mxu0 0
        %2000 = vmatpush1.bf16.msra.mxu0 0
        %2001 = vmatprep.subr.bf16.mxu0 0
        %2002 = vmatpush1.bf16.msra.mxu0 0
        %2003 = vmatprep.subr.bf16.mxu0 0
        %2004 = vmatpush1.bf16.msra.mxu0 0
        %2005 = vmatprep.subr.bf16.mxu0 0
        %2006 = vmatpush1.bf16.msra.mxu0 %v1991
        %2007 = vmatprep.subr.bf16.mxu0 0
        %2008 = vmatpush1.bf16.msra.mxu0 %v1939
        %2009 = vmatprep.subr.bf16.mxu0 0
        %2010 = vmatpush2.bf16.msra.mxu0 0
        %2011 = vmatprep.subr.bf16.mxu0 0
        %2012 = vmatpush2.bf16.msra.mxu0 0
        %2013 = vmatprep.subr.bf16.mxu0 0
        %2014 = vmatpush2.bf16.msra.mxu0 0
        %2015 = vmatprep.subr.bf16.mxu0 0
        %2016 = vmatpush2.bf16.msra.mxu0 0
        %2017 = vmatprep.subr.bf16.mxu0 0
        %2018 = vmatpush2.bf16.msra.mxu0 0
        %2019 = vmatprep.subr.bf16.mxu0 0
        %2020 = vmatpush2.bf16.msra.mxu0 0
        %2021 = vmatprep.subr.bf16.mxu0 0
        %2022 = vmatpush2.bf16.msra.mxu0 0
        %2023 = vmatprep.subr.bf16.mxu0 0
        %2024 = vmatpush2.bf16.msra.mxu0 0
        %2025 = vmatprep.mubr.bf16.mxu0 0
        %2026 = vmatmul.mubr.bf16.gmra.mxu0 %v1943
        %v2027 = vpop.f32.mrf.mxu0
        %v2028 = vadd.f32 0.0, %v2027
        %v2029 = vpop.f32.mrf.mxu0
        %v2030 = vpop.f32.mrf.mxu0
        %v2031 = vadd.f32 0.0, %v2030
        %v2032 = vpop.f32.mrf.mxu0
        %2033 = vmatprep.mubr.bf16.mxu0 0
        %2034 = vmatmul.mubr.bf16.gmra.mxu0 %v1946
        %v2035 = vpop.f32.mrf.mxu0
        %v2036 = vadd.f32 0.0, %v2035
        %v2037 = vpop.f32.mrf.mxu0
        %v2038 = vpop.f32.mrf.mxu0
        %v2039 = vadd.f32 0.0, %v2038
        %v2040 = vpop.f32.mrf.mxu0
        %2041 = vmatprep.mubr.bf16.mxu0 0
        %2042 = vmatmul.mubr.bf16.gmra.mxu0 %v1949
        %v2043 = vpop.f32.mrf.mxu0
        %v2044 = vadd.f32 0.0, %v2043
        %v2045 = vpop.f32.mrf.mxu0
        %v2046 = vpop.f32.mrf.mxu0
        %v2047 = vadd.f32 0.0, %v2046
        %v2048 = vpop.f32.mrf.mxu0
        %2049 = vmatprep.mubr.bf16.mxu0 0
        %2050 = vmatmul.mubr.bf16.gmra.mxu0 %v1952
        %v2051 = vpop.f32.mrf.mxu0
        %v2052 = vadd.f32 0.0, %v2051
        %v2053 = vpop.f32.mrf.mxu0
        %v2054 = vpop.f32.mrf.mxu0
        %v2055 = vadd.f32 0.0, %v2054
        %v2056 = vpop.f32.mrf.mxu0
        %2057 = vmatprep.mubr.bf16.mxu0 0
        %2058 = vmatmul.mubr.bf16.gmra.mxu0 %v1955
        %v2059 = vpop.f32.mrf.mxu0
        %v2060 = vadd.f32 0.0, %v2059
        %v2061 = vpop.f32.mrf.mxu0
        %v2062 = vpop.f32.mrf.mxu0
        %v2063 = vadd.f32 0.0, %v2062
        %v2064 = vpop.f32.mrf.mxu0
        %2065 = vmatprep.mubr.bf16.mxu0 0
        %2066 = vmatmul.mubr.bf16.gmra.mxu0 %v1958
        %v2067 = vpop.f32.mrf.mxu0
        %v2068 = vadd.f32 0.0, %v2067
        %v2069 = vpop.f32.mrf.mxu0
        %v2070 = vpop.f32.mrf.mxu0
        %v2071 = vadd.f32 0.0, %v2070
        %v2072 = vpop.f32.mrf.mxu0
        %2073 = vmatprep.mubr.bf16.mxu0 0
        %2074 = vmatmul.mubr.bf16.gmra.mxu0 %v1961
        %v2075 = vpop.f32.mrf.mxu0
        %v2076 = vadd.f32 0.0, %v2075
        %v2077 = vpop.f32.mrf.mxu0
        %v2078 = vpop.f32.mrf.mxu0
        %v2079 = vadd.f32 0.0, %v2078
        %v2080 = vpop.f32.mrf.mxu0
        %2081 = vmatprep.mubr.bf16.mxu0 0
        %2082 = vmatmul.mubr.bf16.gmra.mxu0 %v1964
        %v2083 = vpop.f32.mrf.mxu0
        %v2084 = vadd.f32 0.0, %v2083
        %v2085 = vpop.f32.mrf.mxu0
        %v2086 = vpop.f32.mrf.mxu0
        %v2087 = vadd.f32 0.0, %v2086
        %v2088 = vpop.f32.mrf.mxu0
        %2089 = vmatprep.mubr.bf16.mxu0 0
        %2090 = vmatmul.mubr.bf16.gmra.mxu0 %v1967
        %v2091 = vpop.f32.mrf.mxu0
        %v2092 = vadd.f32 0.0, %v2091
        %v2093 = vpop.f32.mrf.mxu0
        %v2094 = vpop.f32.mrf.mxu0
        %v2095 = vadd.f32 0.0, %v2094
        %v2096 = vpop.f32.mrf.mxu0
        %2097 = vmatprep.mubr.bf16.mxu0 0
        %2098 = vmatmul.mubr.bf16.gmra.mxu0 %v1970
        %v2099 = vpop.f32.mrf.mxu0
        %v2100 = vadd.f32 0.0, %v2099
        %v2101 = vpop.f32.mrf.mxu0
        %v2102 = vpop.f32.mrf.mxu0
        %v2103 = vadd.f32 0.0, %v2102
        %v2104 = vpop.f32.mrf.mxu0
        %2105 = vmatprep.mubr.bf16.mxu0 0
        %2106 = vmatmul.mubr.bf16.gmra.mxu0 %v1973
        %v2107 = vpop.f32.mrf.mxu0
        %v2108 = vadd.f32 0.0, %v2107
        %v2109 = vpop.f32.mrf.mxu0
        %v2110 = vpop.f32.mrf.mxu0
        %v2111 = vadd.f32 0.0, %v2110
        %v2112 = vpop.f32.mrf.mxu0
        %2113 = vmatprep.mubr.bf16.mxu0 0
        %2114 = vmatmul.mubr.bf16.gmra.mxu0 %v1976
        %v2115 = vpop.f32.mrf.mxu0
        %v2116 = vadd.f32 0.0, %v2115
        %v2117 = vpop.f32.mrf.mxu0
        %v2118 = vpop.f32.mrf.mxu0
        %v2119 = vadd.f32 0.0, %v2118
        %v2120 = vpop.f32.mrf.mxu0
        %2121 = vmatprep.mubr.bf16.mxu0 0
        %2122 = vmatmul.mubr.bf16.gmra.mxu0 %v1979
        %v2123 = vpop.f32.mrf.mxu0
        %v2124 = vadd.f32 0.0, %v2123
        %v2125 = vpop.f32.mrf.mxu0
        %v2126 = vpop.f32.mrf.mxu0
        %v2127 = vadd.f32 0.0, %v2126
        %v2128 = vpop.f32.mrf.mxu0
        %2129 = vmatprep.mubr.bf16.mxu0 0
        %2130 = vmatmul.mubr.bf16.gmra.mxu0 %v1982
        %v2131 = vpop.f32.mrf.mxu0
        %v2132 = vadd.f32 0.0, %v2131
        %v2133 = vpop.f32.mrf.mxu0
        %v2134 = vpop.f32.mrf.mxu0
        %v2135 = vadd.f32 0.0, %v2134
        %v2136 = vpop.f32.mrf.mxu0
        %2137 = vmatprep.mubr.bf16.mxu0 0
        %2138 = vmatmul.mubr.bf16.gmra.mxu0 %v1985
        %v2139 = vpop.f32.mrf.mxu0
        %v2140 = vadd.f32 0.0, %v2139
        %v2141 = vpop.f32.mrf.mxu0
        %v2142 = vpop.f32.mrf.mxu0
        %v2143 = vadd.f32 0.0, %v2142
        %v2144 = vpop.f32.mrf.mxu0
        %2145 = vmatprep.mubr.bf16.mxu0 0
        %2146 = vmatmul.mubr.bf16.gmra.mxu0 %v1988
        %v2147 = vpop.f32.mrf.mxu0
        %v2148 = vadd.f32 0.0, %v2147
        %v2149 = vpop.f32.mrf.mxu0
        %v2150 = vpop.f32.mrf.mxu0
        %v2151 = vadd.f32 0.0, %v2150
        %v2152 = vpop.f32.mrf.mxu0
        %2153 = vdwg.mxu0
        %v2154 = vadd.f32 %v1690, %v2028
        %v2155 = vadd.f32 %v1693, %v2031
        %v2156 = vadd.f32 %v1698, %v2036
        %v2157 = vadd.f32 %v1701, %v2039
        %v2158 = vadd.f32 %v1706, %v2044
        %v2159 = vadd.f32 %v1709, %v2047
        %v2160 = vadd.f32 %v1714, %v2052
        %v2161 = vadd.f32 %v1717, %v2055
        %v2162 = vadd.f32 %v1722, %v2060
        %v2163 = vadd.f32 %v1725, %v2063
        %v2164 = vadd.f32 %v1730, %v2068
        %v2165 = vadd.f32 %v1733, %v2071
        %v2166 = vadd.f32 %v1738, %v2076
        %v2167 = vadd.f32 %v1741, %v2079
        %v2168 = vadd.f32 %v1746, %v2084
        %v2169 = vadd.f32 %v1749, %v2087
        %v2170 = vadd.f32 %v1754, %v2092
        %v2171 = vadd.f32 %v1757, %v2095
        %v2172 = vadd.f32 %v1762, %v2100
        %v2173 = vadd.f32 %v1765, %v2103
        %v2174 = vadd.f32 %v1770, %v2108
        %v2175 = vadd.f32 %v1773, %v2111
        %v2176 = vadd.f32 %v1778, %v2116
        %v2177 = vadd.f32 %v1781, %v2119
        %v2178 = vadd.f32 %v1786, %v2124
        %v2179 = vadd.f32 %v1789, %v2127
        %v2180 = vadd.f32 %v1794, %v2132
        %v2181 = vadd.f32 %v1797, %v2135
        %v2182 = vadd.f32 %v1802, %v2140
        %v2183 = vadd.f32 %v1805, %v2143
        %v2184 = vadd.f32 %v1810, %v2148
        %v2185 = vadd.f32 %v1813, %v2151
        %v2187 = vlaneseq
        %v2188 = vshrl.u32 %v2187, 7
        %v2189 = vsub.s32 0, %v2188
        %v2190 = vrot.slane %v1140, %v2189
        %v2192 = vadd.f32 %v2154, %v2190
        %v2193 = vadd.f32 %v2155, %v2190
        %v2194 = vadd.f32 %v2156, %v2190
        %v2195 = vadd.f32 %v2157, %v2190
        %v2196 = vadd.f32 %v2158, %v2190
        %v2197 = vadd.f32 %v2159, %v2190
        %v2198 = vadd.f32 %v2160, %v2190
        %v2199 = vadd.f32 %v2161, %v2190
        %v2200 = vadd.f32 %v2162, %v2190
        %v2201 = vadd.f32 %v2163, %v2190
        %v2202 = vadd.f32 %v2164, %v2190
        %v2203 = vadd.f32 %v2165, %v2190
        %v2204 = vadd.f32 %v2166, %v2190
        %v2205 = vadd.f32 %v2167, %v2190
        %v2206 = vadd.f32 %v2168, %v2190
        %v2207 = vadd.f32 %v2169, %v2190
        %v2208 = vadd.f32 %v2170, %v2190
        %v2209 = vadd.f32 %v2171, %v2190
        %v2210 = vadd.f32 %v2172, %v2190
        %v2211 = vadd.f32 %v2173, %v2190
        %v2212 = vadd.f32 %v2174, %v2190
        %v2213 = vadd.f32 %v2175, %v2190
        %v2214 = vadd.f32 %v2176, %v2190
        %v2215 = vadd.f32 %v2177, %v2190
        %v2216 = vadd.f32 %v2178, %v2190
        %v2217 = vadd.f32 %v2179, %v2190
        %v2218 = vadd.f32 %v2180, %v2190
        %v2219 = vadd.f32 %v2181, %v2190
        %v2220 = vadd.f32 %v2182, %v2190
        %v2221 = vadd.f32 %v2183, %v2190
        %v2222 = vadd.f32 %v2184, %v2190
        %v2223 = vadd.f32 %v2185, %v2190
        %v2224 = vmax.f32 %v2192, 0.0
        %v2225 = vmax.f32 %v2193, 0.0
        %v2226 = vmax.f32 %v2194, 0.0
        %v2227 = vmax.f32 %v2195, 0.0
        %v2228 = vmax.f32 %v2196, 0.0
        %v2229 = vmax.f32 %v2197, 0.0
        %v2230 = vmax.f32 %v2198, 0.0
        %v2231 = vmax.f32 %v2199, 0.0
        %v2232 = vmax.f32 %v2200, 0.0
        %v2233 = vmax.f32 %v2201, 0.0
        %v2234 = vmax.f32 %v2202, 0.0
        %v2235 = vmax.f32 %v2203, 0.0
        %v2236 = vmax.f32 %v2204, 0.0
        %v2237 = vmax.f32 %v2205, 0.0
        %v2238 = vmax.f32 %v2206, 0.0
        %v2239 = vmax.f32 %v2207, 0.0
        %v2240 = vmax.f32 %v2208, 0.0
        %v2241 = vmax.f32 %v2209, 0.0
        %v2242 = vmax.f32 %v2210, 0.0
        %v2243 = vmax.f32 %v2211, 0.0
        %v2244 = vmax.f32 %v2212, 0.0
        %v2245 = vmax.f32 %v2213, 0.0
        %v2246 = vmax.f32 %v2214, 0.0
        %v2247 = vmax.f32 %v2215, 0.0
        %v2248 = vmax.f32 %v2216, 0.0
        %v2249 = vmax.f32 %v2217, 0.0
        %v2250 = vmax.f32 %v2218, 0.0
        %v2251 = vmax.f32 %v2219, 0.0
        %v2252 = vmax.f32 %v2220, 0.0
        %v2253 = vmax.f32 %v2221, 0.0
        %v2254 = vmax.f32 %v2222, 0.0
        %v2255 = vmax.f32 %v2223, 0.0
        %vm2256 = vcmask 261120
        %2257 = vst.msk [vmem:[%s163] sm:$0xff] %vm2256, %v2224
        %2258 = vst.msk [vmem:[%s163 + $0x8] sm:$0xff] %vm2256, %v2225
        %2259 = vst.msk [vmem:[%s163 + $0x20] sm:$0xff] %vm2256, %v2226
        %2260 = vst.msk [vmem:[%s163 + $0x28] sm:$0xff] %vm2256, %v2227
        %2261 = vst.msk [vmem:[%s163 + $0x40] sm:$0xff] %vm2256, %v2228
        %2262 = vst.msk [vmem:[%s163 + $0x48] sm:$0xff] %vm2256, %v2229
        %2263 = vst.msk [vmem:[%s163 + $0x60] sm:$0xff] %vm2256, %v2230
        %2264 = vst.msk [vmem:[%s163 + $0x68] sm:$0xff] %vm2256, %v2231
        %2265 = vst.msk [vmem:[%s163 + $0x80] sm:$0xff] %vm2256, %v2232
        %2266 = vst.msk [vmem:[%s163 + $0x88] sm:$0xff] %vm2256, %v2233
        %2267 = vst.msk [vmem:[%s163 + $0xa0] sm:$0xff] %vm2256, %v2234
        %2268 = vst.msk [vmem:[%s163 + $0xa8] sm:$0xff] %vm2256, %v2235
        %2269 = vst.msk [vmem:[%s163 + $0xc0] sm:$0xff] %vm2256, %v2236
        %2270 = vst.msk [vmem:[%s163 + $0xc8] sm:$0xff] %vm2256, %v2237
        %2271 = vst.msk [vmem:[%s163 + $0xe0] sm:$0xff] %vm2256, %v2238
        %2272 = vst.msk [vmem:[%s163 + $0xe8] sm:$0xff] %vm2256, %v2239
        %2273 = vst.msk [vmem:[%s163 + $0x100] sm:$0xff] %vm2256, %v2240
        %2274 = vst.msk [vmem:[%s163 + $0x108] sm:$0xff] %vm2256, %v2241
        %2275 = vst.msk [vmem:[%s163 + $0x120] sm:$0xff] %vm2256, %v2242
        %2276 = vst.msk [vmem:[%s163 + $0x128] sm:$0xff] %vm2256, %v2243
        %2277 = vst.msk [vmem:[%s163 + $0x140] sm:$0xff] %vm2256, %v2244
        %2278 = vst.msk [vmem:[%s163 + $0x148] sm:$0xff] %vm2256, %v2245
        %2279 = vst.msk [vmem:[%s163 + $0x160] sm:$0xff] %vm2256, %v2246
        %2280 = vst.msk [vmem:[%s163 + $0x168] sm:$0xff] %vm2256, %v2247
        %2281 = vst.msk [vmem:[%s163 + $0x180] sm:$0xff] %vm2256, %v2248
        %2282 = vst.msk [vmem:[%s163 + $0x188] sm:$0xff] %vm2256, %v2249
        %2283 = vst.msk [vmem:[%s163 + $0x1a0] sm:$0xff] %vm2256, %v2250
        %2284 = vst.msk [vmem:[%s163 + $0x1a8] sm:$0xff] %vm2256, %v2251
        %2285 = vst.msk [vmem:[%s163 + $0x1c0] sm:$0xff] %vm2256, %v2252
        %2286 = vst.msk [vmem:[%s163 + $0x1c8] sm:$0xff] %vm2256, %v2253
        %2287 = vst.msk [vmem:[%s163 + $0x1e0] sm:$0xff] %vm2256, %v2254
        %2288 = vst.msk [vmem:[%s163 + $0x1e8] sm:$0xff] %vm2256, %v2255
        %v2289 = vld [vmem:[%s176] sm:$0xf]
        %v2290 = vld [vmem:[%s176 + $0x4] sm:$0xf]
        %v2291 = vld [vmem:[%s176 + $0x8] sm:$0xf]
        %v2292 = vld [vmem:[%s176 + $0xc] sm:$0xf]
        %v2293 = vld [vmem:[%s176 + $0x10] sm:$0xf]
        %v2294 = vld [vmem:[%s176 + $0x14] sm:$0xf]
        %v2295 = vld [vmem:[%s176 + $0x18] sm:$0xf]
        %v2296 = vld [vmem:[%s176 + $0x1c] sm:$0xf]
        %v2297 = vld [vmem:[%s176 + $0x20] sm:$0xf]
        %v2298 = vld [vmem:[%s176 + $0x24] sm:$0xf]
        %v2299 = vld [vmem:[%s176 + $0x28] sm:$0xf]
        %v2300 = vld [vmem:[%s176 + $0x2c] sm:$0xf]
        %v2301 = vld [vmem:[%s176 + $0x30] sm:$0xf]
        %v2302 = vld [vmem:[%s176 + $0x34] sm:$0xf]
        %v2303 = vld [vmem:[%s176 + $0x38] sm:$0xf]
        %v2304 = vld [vmem:[%s176 + $0x3c] sm:$0xf]
        %v2305 = vld [vmem:[%s176 + $0x40] sm:$0xf]
        %v2306 = vld [vmem:[%s176 + $0x44] sm:$0xf]
        %v2307 = vld [vmem:[%s176 + $0x48] sm:$0xf]
        %v2308 = vld [vmem:[%s176 + $0x4c] sm:$0xf]
        %v2309 = vld [vmem:[%s176 + $0x50] sm:$0xf]
        %v2310 = vld [vmem:[%s176 + $0x54] sm:$0xf]
        %v2311 = vld [vmem:[%s176 + $0x58] sm:$0xf]
        %v2312 = vld [vmem:[%s176 + $0x5c] sm:$0xf]
        %v2313 = vld [vmem:[%s176 + $0x60] sm:$0xf]
        %v2314 = vld [vmem:[%s176 + $0x64] sm:$0xf]
        %v2315 = vld [vmem:[%s176 + $0x68] sm:$0xf]
        %v2316 = vld [vmem:[%s176 + $0x6c] sm:$0xf]
        %v2317 = vld [vmem:[%s176 + $0x70] sm:$0xf]
        %v2318 = vld [vmem:[%s176 + $0x74] sm:$0xf]
        %v2319 = vld [vmem:[%s176 + $0x78] sm:$0xf]
        %v2320 = vld [vmem:[%s176 + $0x7c] sm:$0xf]
        %s2321 = scalar_lea.vmem %s1, 36
        %v2322 = vld [vmem:[%s2321] sm:$0xf]
        %v2323 = vld [vmem:[%s2321 + $0x4] sm:$0xf]
        %v2324 = vld [vmem:[%s2321 + $0x8] sm:$0xf]
        %v2325 = vld [vmem:[%s1816] sm:$0xf]
        %v2326 = vld [vmem:[%s1816 + $0x4] sm:$0xf]
        %v2327 = vld [vmem:[%s1816 + $0x8] sm:$0xf]
        %v2328 = vld [vmem:[%s1816 + $0xc] sm:$0xf]
        %v2329 = vld [vmem:[%s1816 + $0x10] sm:$0xf]
        %v2330 = vld [vmem:[%s1816 + $0x14] sm:$0xf]
        %v2331 = vld [vmem:[%s1816 + $0x18] sm:$0xf]
        %v2332 = vld [vmem:[%s1816 + $0x1c] sm:$0xf]
        %v2333 = vld [vmem:[%s1816 + $0x20] sm:$0xf]
        %v2334 = vld [vmem:[%s1816 + $0x24] sm:$0xf]
        %v2335 = vld [vmem:[%s1816 + $0x28] sm:$0xf]
        %v2336 = vld [vmem:[%s1816 + $0x2c] sm:$0xf]
        %v2337 = vld [vmem:[%s1816 + $0x30] sm:$0xf]
        %v2338 = vld [vmem:[%s1816 + $0x34] sm:$0xf]
        %v2339 = vld [vmem:[%s1816 + $0x38] sm:$0xf]
        %v2340 = vld [vmem:[%s1816 + $0x3c] sm:$0xf]
        %v2341 = vld [vmem:[%s1816 + $0x40] sm:$0xf]
        %v2342 = vld [vmem:[%s1816 + $0x44] sm:$0xf]
        %v2343 = vld [vmem:[%s1816 + $0x48] sm:$0xf]
        %v2344 = vld [vmem:[%s1816 + $0x4c] sm:$0xf]
        %v2345 = vld [vmem:[%s1816 + $0x50] sm:$0xf]
        %v2346 = vld [vmem:[%s1816 + $0x54] sm:$0xf]
        %v2347 = vld [vmem:[%s1816 + $0x58] sm:$0xf]
        %v2348 = vld [vmem:[%s1816 + $0x5c] sm:$0xf]
        %v2349 = vld [vmem:[%s1816 + $0x60] sm:$0xf]
        %v2350 = vld [vmem:[%s1816 + $0x64] sm:$0xf]
        %v2351 = vld [vmem:[%s1816 + $0x68] sm:$0xf]
        %v2352 = vld [vmem:[%s1816 + $0x6c] sm:$0xf]
        %v2353 = vld [vmem:[%s1816 + $0x70] sm:$0xf]
        %v2354 = vld [vmem:[%s1816 + $0x74] sm:$0xf]
        %v2355 = vld [vmem:[%s1816 + $0x78] sm:$0xf]
        %v2356 = vld [vmem:[%s1816 + $0x7c] sm:$0xf]
        %s2357 = scalar_lea.vmem %s1, 48
        %v2358 = vld [vmem:[%s2357] sm:$0xf]
        %v2359 = vld [vmem:[%s2357 + $0x4] sm:$0xf]
        %v2360 = vld [vmem:[%s2357 + $0x8] sm:$0xf]
        %v2393 = vunpack.c.l.b16 %v2325
        %v2394 = vunpack.c.l.b16 %v2326
        %v2395 = vunpack.c.l.b16 %v2327
        %v2396 = vunpack.c.l.b16 %v2328
        %v2397 = vunpack.c.l.b16 %v2329
        %v2398 = vunpack.c.l.b16 %v2330
        %v2399 = vunpack.c.l.b16 %v2331
        %v2400 = vunpack.c.l.b16 %v2332
        %v2401 = vunpack.c.l.b16 %v2333
        %v2402 = vunpack.c.l.b16 %v2334
        %v2403 = vunpack.c.l.b16 %v2335
        %v2404 = vunpack.c.l.b16 %v2336
        %v2405 = vunpack.c.l.b16 %v2337
        %v2406 = vunpack.c.l.b16 %v2338
        %v2407 = vunpack.c.l.b16 %v2339
        %v2408 = vunpack.c.l.b16 %v2340
        %v2409 = vunpack.c.l.b16 %v2341
        %v2410 = vunpack.c.l.b16 %v2342
        %v2411 = vunpack.c.l.b16 %v2343
        %v2412 = vunpack.c.l.b16 %v2344
        %v2413 = vunpack.c.l.b16 %v2345
        %v2414 = vunpack.c.l.b16 %v2346
        %v2415 = vunpack.c.l.b16 %v2347
        %v2416 = vunpack.c.l.b16 %v2348
        %v2417 = vunpack.c.l.b16 %v2349
        %v2418 = vunpack.c.l.b16 %v2350
        %v2419 = vunpack.c.l.b16 %v2351
        %v2420 = vunpack.c.l.b16 %v2352
        %v2421 = vunpack.c.l.b16 %v2353
        %v2422 = vunpack.c.l.b16 %v2354
        %v2423 = vunpack.c.l.b16 %v2355
        %v2424 = vunpack.c.l.b16 %v2356
        %v2425 = vpack.c.b16 %v2394, %v2393
        %v2426 = vpack.c.b16 %v2396, %v2395
        %v2427 = vpack.c.b16 %v2398, %v2397
        %v2428 = vpack.c.b16 %v2400, %v2399
        %v2429 = vpack.c.b16 %v2402, %v2401
        %v2430 = vpack.c.b16 %v2404, %v2403
        %v2431 = vpack.c.b16 %v2406, %v2405
        %v2432 = vpack.c.b16 %v2408, %v2407
        %v2433 = vpack.c.b16 %v2410, %v2409
        %v2434 = vpack.c.b16 %v2412, %v2411
        %v2435 = vpack.c.b16 %v2414, %v2413
        %v2436 = vpack.c.b16 %v2416, %v2415
        %v2437 = vpack.c.b16 %v2418, %v2417
        %v2438 = vpack.c.b16 %v2420, %v2419
        %v2439 = vpack.c.b16 %v2422, %v2421
        %v2440 = vpack.c.b16 %v2424, %v2423
        %v2444 = vunpack.c.l.b16 %v2358
        %v2445 = vunpack.c.l.b16 %v2359
        %v2446 = vunpack.c.l.b16 %v2360
        %v2447 = vpack.c.b16 %v2445, %v2444
        %v2448 = vpack.c.b16 %v2446, %v2446
        %v2451 = vsel %vm1301, %v2425, 0
        %v2454 = vsel %vm1301, %v2426, 0
        %v2457 = vsel %vm1301, %v2427, 0
        %v2460 = vsel %vm1301, %v2428, 0
        %v2463 = vsel %vm1301, %v2429, 0
        %v2466 = vsel %vm1301, %v2430, 0
        %v2469 = vsel %vm1301, %v2431, 0
        %v2472 = vsel %vm1301, %v2432, 0
        %v2475 = vsel %vm1301, %v2433, 0
        %v2478 = vsel %vm1301, %v2434, 0
        %v2481 = vsel %vm1301, %v2435, 0
        %v2484 = vsel %vm1301, %v2436, 0
        %v2487 = vsel %vm1301, %v2437, 0
        %v2490 = vsel %vm1301, %v2438, 0
        %v2493 = vsel %vm1301, %v2439, 0
        %v2496 = vsel %vm1301, %v2440, 0
        %v2499 = vsel %vm1350, %v2448, 0
        %2501 = vmatprep.subr.bf16.mxu0 0
        %2502 = vmatpush1.bf16.msra.mxu0 0
        %2503 = vmatprep.subr.bf16.mxu0 0
        %2504 = vmatpush1.bf16.msra.mxu0 0
        %2505 = vmatprep.subr.bf16.mxu0 0
        %2506 = vmatpush1.bf16.msra.mxu0 0
        %2507 = vmatprep.subr.bf16.mxu0 0
        %2508 = vmatpush1.bf16.msra.mxu0 0
        %2509 = vmatprep.subr.bf16.mxu0 0
        %2510 = vmatpush1.bf16.msra.mxu0 0
        %2511 = vmatprep.subr.bf16.mxu0 0
        %2512 = vmatpush1.bf16.msra.mxu0 0
        %2513 = vmatprep.subr.bf16.mxu0 0
        %2514 = vmatpush1.bf16.msra.mxu0 %v2499
        %2515 = vmatprep.subr.bf16.mxu0 0
        %2516 = vmatpush1.bf16.msra.mxu0 %v2447
        %2517 = vmatprep.subr.bf16.mxu0 0
        %2518 = vmatpush2.bf16.msra.mxu0 0
        %2519 = vmatprep.subr.bf16.mxu0 0
        %2520 = vmatpush2.bf16.msra.mxu0 0
        %2521 = vmatprep.subr.bf16.mxu0 0
        %2522 = vmatpush2.bf16.msra.mxu0 0
        %2523 = vmatprep.subr.bf16.mxu0 0
        %2524 = vmatpush2.bf16.msra.mxu0 0
        %2525 = vmatprep.subr.bf16.mxu0 0
        %2526 = vmatpush2.bf16.msra.mxu0 0
        %2527 = vmatprep.subr.bf16.mxu0 0
        %2528 = vmatpush2.bf16.msra.mxu0 0
        %2529 = vmatprep.subr.bf16.mxu0 0
        %2530 = vmatpush2.bf16.msra.mxu0 0
        %2531 = vmatprep.subr.bf16.mxu0 0
        %2532 = vmatpush2.bf16.msra.mxu0 0
        %2533 = vmatprep.mubr.bf16.mxu0 0
        %2534 = vmatmul.mubr.bf16.gmra.mxu0 %v2451
        %v2535 = vpop.f32.mrf.mxu0
        %v2536 = vadd.f32 0.0, %v2535
        %v2537 = vpop.f32.mrf.mxu0
        %v2538 = vpop.f32.mrf.mxu0
        %v2539 = vadd.f32 0.0, %v2538
        %v2540 = vpop.f32.mrf.mxu0
        %2541 = vmatprep.mubr.bf16.mxu0 0
        %2542 = vmatmul.mubr.bf16.gmra.mxu0 %v2454
        %v2543 = vpop.f32.mrf.mxu0
        %v2544 = vadd.f32 0.0, %v2543
        %v2545 = vpop.f32.mrf.mxu0
        %v2546 = vpop.f32.mrf.mxu0
        %v2547 = vadd.f32 0.0, %v2546
        %v2548 = vpop.f32.mrf.mxu0
        %2549 = vmatprep.mubr.bf16.mxu0 0
        %2550 = vmatmul.mubr.bf16.gmra.mxu0 %v2457
        %v2551 = vpop.f32.mrf.mxu0
        %v2552 = vadd.f32 0.0, %v2551
        %v2553 = vpop.f32.mrf.mxu0
        %v2554 = vpop.f32.mrf.mxu0
        %v2555 = vadd.f32 0.0, %v2554
        %v2556 = vpop.f32.mrf.mxu0
        %2557 = vmatprep.mubr.bf16.mxu0 0
        %2558 = vmatmul.mubr.bf16.gmra.mxu0 %v2460
        %v2559 = vpop.f32.mrf.mxu0
        %v2560 = vadd.f32 0.0, %v2559
        %v2561 = vpop.f32.mrf.mxu0
        %v2562 = vpop.f32.mrf.mxu0
        %v2563 = vadd.f32 0.0, %v2562
        %v2564 = vpop.f32.mrf.mxu0
        %2565 = vmatprep.mubr.bf16.mxu0 0
        %2566 = vmatmul.mubr.bf16.gmra.mxu0 %v2463
        %v2567 = vpop.f32.mrf.mxu0
        %v2568 = vadd.f32 0.0, %v2567
        %v2569 = vpop.f32.mrf.mxu0
        %v2570 = vpop.f32.mrf.mxu0
        %v2571 = vadd.f32 0.0, %v2570
        %v2572 = vpop.f32.mrf.mxu0
        %2573 = vmatprep.mubr.bf16.mxu0 0
        %2574 = vmatmul.mubr.bf16.gmra.mxu0 %v2466
        %v2575 = vpop.f32.mrf.mxu0
        %v2576 = vadd.f32 0.0, %v2575
        %v2577 = vpop.f32.mrf.mxu0
        %v2578 = vpop.f32.mrf.mxu0
        %v2579 = vadd.f32 0.0, %v2578
        %v2580 = vpop.f32.mrf.mxu0
        %2581 = vmatprep.mubr.bf16.mxu0 0
        %2582 = vmatmul.mubr.bf16.gmra.mxu0 %v2469
        %v2583 = vpop.f32.mrf.mxu0
        %v2584 = vadd.f32 0.0, %v2583
        %v2585 = vpop.f32.mrf.mxu0
        %v2586 = vpop.f32.mrf.mxu0
        %v2587 = vadd.f32 0.0, %v2586
        %v2588 = vpop.f32.mrf.mxu0
        %2589 = vmatprep.mubr.bf16.mxu0 0
        %2590 = vmatmul.mubr.bf16.gmra.mxu0 %v2472
        %v2591 = vpop.f32.mrf.mxu0
        %v2592 = vadd.f32 0.0, %v2591
        %v2593 = vpop.f32.mrf.mxu0
        %v2594 = vpop.f32.mrf.mxu0
        %v2595 = vadd.f32 0.0, %v2594
        %v2596 = vpop.f32.mrf.mxu0
        %2597 = vmatprep.mubr.bf16.mxu0 0
        %2598 = vmatmul.mubr.bf16.gmra.mxu0 %v2475
        %v2599 = vpop.f32.mrf.mxu0
        %v2600 = vadd.f32 0.0, %v2599
        %v2601 = vpop.f32.mrf.mxu0
        %v2602 = vpop.f32.mrf.mxu0
        %v2603 = vadd.f32 0.0, %v2602
        %v2604 = vpop.f32.mrf.mxu0
        %2605 = vmatprep.mubr.bf16.mxu0 0
        %2606 = vmatmul.mubr.bf16.gmra.mxu0 %v2478
        %v2607 = vpop.f32.mrf.mxu0
        %v2608 = vadd.f32 0.0, %v2607
        %v2609 = vpop.f32.mrf.mxu0
        %v2610 = vpop.f32.mrf.mxu0
        %v2611 = vadd.f32 0.0, %v2610
        %v2612 = vpop.f32.mrf.mxu0
        %2613 = vmatprep.mubr.bf16.mxu0 0
        %2614 = vmatmul.mubr.bf16.gmra.mxu0 %v2481
        %v2615 = vpop.f32.mrf.mxu0
        %v2616 = vadd.f32 0.0, %v2615
        %v2617 = vpop.f32.mrf.mxu0
        %v2618 = vpop.f32.mrf.mxu0
        %v2619 = vadd.f32 0.0, %v2618
        %v2620 = vpop.f32.mrf.mxu0
        %2621 = vmatprep.mubr.bf16.mxu0 0
        %2622 = vmatmul.mubr.bf16.gmra.mxu0 %v2484
        %v2623 = vpop.f32.mrf.mxu0
        %v2624 = vadd.f32 0.0, %v2623
        %v2625 = vpop.f32.mrf.mxu0
        %v2626 = vpop.f32.mrf.mxu0
        %v2627 = vadd.f32 0.0, %v2626
        %v2628 = vpop.f32.mrf.mxu0
        %2629 = vmatprep.mubr.bf16.mxu0 0
        %2630 = vmatmul.mubr.bf16.gmra.mxu0 %v2487
        %v2631 = vpop.f32.mrf.mxu0
        %v2632 = vadd.f32 0.0, %v2631
        %v2633 = vpop.f32.mrf.mxu0
        %v2634 = vpop.f32.mrf.mxu0
        %v2635 = vadd.f32 0.0, %v2634
        %v2636 = vpop.f32.mrf.mxu0
        %2637 = vmatprep.mubr.bf16.mxu0 0
        %2638 = vmatmul.mubr.bf16.gmra.mxu0 %v2490
        %v2639 = vpop.f32.mrf.mxu0
        %v2640 = vadd.f32 0.0, %v2639
        %v2641 = vpop.f32.mrf.mxu0
        %v2642 = vpop.f32.mrf.mxu0
        %v2643 = vadd.f32 0.0, %v2642
        %v2644 = vpop.f32.mrf.mxu0
        %2645 = vmatprep.mubr.bf16.mxu0 0
        %2646 = vmatmul.mubr.bf16.gmra.mxu0 %v2493
        %v2647 = vpop.f32.mrf.mxu0
        %v2648 = vadd.f32 0.0, %v2647
        %v2649 = vpop.f32.mrf.mxu0
        %v2650 = vpop.f32.mrf.mxu0
        %v2651 = vadd.f32 0.0, %v2650
        %v2652 = vpop.f32.mrf.mxu0
        %2653 = vmatprep.mubr.bf16.mxu0 0
        %2654 = vmatmul.mubr.bf16.gmra.mxu0 %v2496
        %v2655 = vpop.f32.mrf.mxu0
        %v2656 = vadd.f32 0.0, %v2655
        %v2657 = vpop.f32.mrf.mxu0
        %v2658 = vpop.f32.mrf.mxu0
        %v2659 = vadd.f32 0.0, %v2658
        %v2660 = vpop.f32.mrf.mxu0
        %2661 = vdwg.mxu0
        %v2694 = vunpack.c.l.b16 %v2289
        %v2695 = vunpack.c.l.b16 %v2290
        %v2696 = vunpack.c.l.b16 %v2291
        %v2697 = vunpack.c.l.b16 %v2292
        %v2698 = vunpack.c.l.b16 %v2293
        %v2699 = vunpack.c.l.b16 %v2294
        %v2700 = vunpack.c.l.b16 %v2295
        %v2701 = vunpack.c.l.b16 %v2296
        %v2702 = vunpack.c.l.b16 %v2297
        %v2703 = vunpack.c.l.b16 %v2298
        %v2704 = vunpack.c.l.b16 %v2299
        %v2705 = vunpack.c.l.b16 %v2300
        %v2706 = vunpack.c.l.b16 %v2301
        %v2707 = vunpack.c.l.b16 %v2302
        %v2708 = vunpack.c.l.b16 %v2303
        %v2709 = vunpack.c.l.b16 %v2304
        %v2710 = vunpack.c.l.b16 %v2305
        %v2711 = vunpack.c.l.b16 %v2306
        %v2712 = vunpack.c.l.b16 %v2307
        %v2713 = vunpack.c.l.b16 %v2308
        %v2714 = vunpack.c.l.b16 %v2309
        %v2715 = vunpack.c.l.b16 %v2310
        %v2716 = vunpack.c.l.b16 %v2311
        %v2717 = vunpack.c.l.b16 %v2312
        %v2718 = vunpack.c.l.b16 %v2313
        %v2719 = vunpack.c.l.b16 %v2314
        %v2720 = vunpack.c.l.b16 %v2315
        %v2721 = vunpack.c.l.b16 %v2316
        %v2722 = vunpack.c.l.b16 %v2317
        %v2723 = vunpack.c.l.b16 %v2318
        %v2724 = vunpack.c.l.b16 %v2319
        %v2725 = vunpack.c.l.b16 %v2320
        %v2726 = vpack.c.b16 %v2695, %v2694
        %v2727 = vpack.c.b16 %v2697, %v2696
        %v2728 = vpack.c.b16 %v2699, %v2698
        %v2729 = vpack.c.b16 %v2701, %v2700
        %v2730 = vpack.c.b16 %v2703, %v2702
        %v2731 = vpack.c.b16 %v2705, %v2704
        %v2732 = vpack.c.b16 %v2707, %v2706
        %v2733 = vpack.c.b16 %v2709, %v2708
        %v2734 = vpack.c.b16 %v2711, %v2710
        %v2735 = vpack.c.b16 %v2713, %v2712
        %v2736 = vpack.c.b16 %v2715, %v2714
        %v2737 = vpack.c.b16 %v2717, %v2716
        %v2738 = vpack.c.b16 %v2719, %v2718
        %v2739 = vpack.c.b16 %v2721, %v2720
        %v2740 = vpack.c.b16 %v2723, %v2722
        %v2741 = vpack.c.b16 %v2725, %v2724
        %v2745 = vunpack.c.l.b16 %v2322
        %v2746 = vunpack.c.l.b16 %v2323
        %v2747 = vunpack.c.l.b16 %v2324
        %v2748 = vpack.c.b16 %v2746, %v2745
        %v2749 = vpack.c.b16 %v2747, %v2747
        %v2752 = vsel %vm1301, %v2726, 0
        %v2755 = vsel %vm1301, %v2727, 0
        %v2758 = vsel %vm1301, %v2728, 0
        %v2761 = vsel %vm1301, %v2729, 0
        %v2764 = vsel %vm1301, %v2730, 0
        %v2767 = vsel %vm1301, %v2731, 0
        %v2770 = vsel %vm1301, %v2732, 0
        %v2773 = vsel %vm1301, %v2733, 0
        %v2776 = vsel %vm1301, %v2734, 0
        %v2779 = vsel %vm1301, %v2735, 0
        %v2782 = vsel %vm1301, %v2736, 0
        %v2785 = vsel %vm1301, %v2737, 0
        %v2788 = vsel %vm1301, %v2738, 0
        %v2791 = vsel %vm1301, %v2739, 0
        %v2794 = vsel %vm1301, %v2740, 0
        %v2797 = vsel %vm1301, %v2741, 0
        %v2800 = vsel %vm1350, %v2749, 0
        %2802 = vmatprep.subr.bf16.mxu0 0
        %2803 = vmatpush1.bf16.msra.mxu0 0
        %2804 = vmatprep.subr.bf16.mxu0 0
        %2805 = vmatpush1.bf16.msra.mxu0 0
        %2806 = vmatprep.subr.bf16.mxu0 0
        %2807 = vmatpush1.bf16.msra.mxu0 0
        %2808 = vmatprep.subr.bf16.mxu0 0
        %2809 = vmatpush1.bf16.msra.mxu0 0
        %2810 = vmatprep.subr.bf16.mxu0 0
        %2811 = vmatpush1.bf16.msra.mxu0 0
        %2812 = vmatprep.subr.bf16.mxu0 0
        %2813 = vmatpush1.bf16.msra.mxu0 0
        %2814 = vmatprep.subr.bf16.mxu0 0
        %2815 = vmatpush1.bf16.msra.mxu0 %v2800
        %2816 = vmatprep.subr.bf16.mxu0 0
        %2817 = vmatpush1.bf16.msra.mxu0 %v2748
        %2818 = vmatprep.subr.bf16.mxu0 0
        %2819 = vmatpush2.bf16.msra.mxu0 0
        %2820 = vmatprep.subr.bf16.mxu0 0
        %2821 = vmatpush2.bf16.msra.mxu0 0
        %2822 = vmatprep.subr.bf16.mxu0 0
        %2823 = vmatpush2.bf16.msra.mxu0 0
        %2824 = vmatprep.subr.bf16.mxu0 0
        %2825 = vmatpush2.bf16.msra.mxu0 0
        %2826 = vmatprep.subr.bf16.mxu0 0
        %2827 = vmatpush2.bf16.msra.mxu0 0
        %2828 = vmatprep.subr.bf16.mxu0 0
        %2829 = vmatpush2.bf16.msra.mxu0 0
        %2830 = vmatprep.subr.bf16.mxu0 0
        %2831 = vmatpush2.bf16.msra.mxu0 0
        %2832 = vmatprep.subr.bf16.mxu0 0
        %2833 = vmatpush2.bf16.msra.mxu0 0
        %2834 = vmatprep.mubr.bf16.mxu0 0
        %2835 = vmatmul.mubr.bf16.gmra.mxu0 %v2752
        %v2836 = vpop.f32.mrf.mxu0
        %v2837 = vadd.f32 %v2536, %v2836
        %v2838 = vpop.f32.mrf.mxu0
        %v2839 = vpop.f32.mrf.mxu0
        %v2840 = vadd.f32 %v2539, %v2839
        %v2841 = vpop.f32.mrf.mxu0
        %2842 = vmatprep.mubr.bf16.mxu0 0
        %2843 = vmatmul.mubr.bf16.gmra.mxu0 %v2755
        %v2844 = vpop.f32.mrf.mxu0
        %v2845 = vadd.f32 %v2544, %v2844
        %v2846 = vpop.f32.mrf.mxu0
        %v2847 = vpop.f32.mrf.mxu0
        %v2848 = vadd.f32 %v2547, %v2847
        %v2849 = vpop.f32.mrf.mxu0
        %2850 = vmatprep.mubr.bf16.mxu0 0
        %2851 = vmatmul.mubr.bf16.gmra.mxu0 %v2758
        %v2852 = vpop.f32.mrf.mxu0
        %v2853 = vadd.f32 %v2552, %v2852
        %v2854 = vpop.f32.mrf.mxu0
        %v2855 = vpop.f32.mrf.mxu0
        %v2856 = vadd.f32 %v2555, %v2855
        %v2857 = vpop.f32.mrf.mxu0
        %2858 = vmatprep.mubr.bf16.mxu0 0
        %2859 = vmatmul.mubr.bf16.gmra.mxu0 %v2761
        %v2860 = vpop.f32.mrf.mxu0
        %v2861 = vadd.f32 %v2560, %v2860
        %v2862 = vpop.f32.mrf.mxu0
        %v2863 = vpop.f32.mrf.mxu0
        %v2864 = vadd.f32 %v2563, %v2863
        %v2865 = vpop.f32.mrf.mxu0
        %2866 = vmatprep.mubr.bf16.mxu0 0
        %2867 = vmatmul.mubr.bf16.gmra.mxu0 %v2764
        %v2868 = vpop.f32.mrf.mxu0
        %v2869 = vadd.f32 %v2568, %v2868
        %v2870 = vpop.f32.mrf.mxu0
        %v2871 = vpop.f32.mrf.mxu0
        %v2872 = vadd.f32 %v2571, %v2871
        %v2873 = vpop.f32.mrf.mxu0
        %2874 = vmatprep.mubr.bf16.mxu0 0
        %2875 = vmatmul.mubr.bf16.gmra.mxu0 %v2767
        %v2876 = vpop.f32.mrf.mxu0
        %v2877 = vadd.f32 %v2576, %v2876
        %v2878 = vpop.f32.mrf.mxu0
        %v2879 = vpop.f32.mrf.mxu0
        %v2880 = vadd.f32 %v2579, %v2879
        %v2881 = vpop.f32.mrf.mxu0
        %2882 = vmatprep.mubr.bf16.mxu0 0
        %2883 = vmatmul.mubr.bf16.gmra.mxu0 %v2770
        %v2884 = vpop.f32.mrf.mxu0
        %v2885 = vadd.f32 %v2584, %v2884
        %v2886 = vpop.f32.mrf.mxu0
        %v2887 = vpop.f32.mrf.mxu0
        %v2888 = vadd.f32 %v2587, %v2887
        %v2889 = vpop.f32.mrf.mxu0
        %2890 = vmatprep.mubr.bf16.mxu0 0
        %2891 = vmatmul.mubr.bf16.gmra.mxu0 %v2773
        %v2892 = vpop.f32.mrf.mxu0
        %v2893 = vadd.f32 %v2592, %v2892
        %v2894 = vpop.f32.mrf.mxu0
        %v2895 = vpop.f32.mrf.mxu0
        %v2896 = vadd.f32 %v2595, %v2895
        %v2897 = vpop.f32.mrf.mxu0
        %2898 = vmatprep.mubr.bf16.mxu0 0
        %2899 = vmatmul.mubr.bf16.gmra.mxu0 %v2776
        %v2900 = vpop.f32.mrf.mxu0
        %v2901 = vadd.f32 %v2600, %v2900
        %v2902 = vpop.f32.mrf.mxu0
        %v2903 = vpop.f32.mrf.mxu0
        %v2904 = vadd.f32 %v2603, %v2903
        %v2905 = vpop.f32.mrf.mxu0
        %2906 = vmatprep.mubr.bf16.mxu0 0
        %2907 = vmatmul.mubr.bf16.gmra.mxu0 %v2779
        %v2908 = vpop.f32.mrf.mxu0
        %v2909 = vadd.f32 %v2608, %v2908
        %v2910 = vpop.f32.mrf.mxu0
        %v2911 = vpop.f32.mrf.mxu0
        %v2912 = vadd.f32 %v2611, %v2911
        %v2913 = vpop.f32.mrf.mxu0
        %2914 = vmatprep.mubr.bf16.mxu0 0
        %2915 = vmatmul.mubr.bf16.gmra.mxu0 %v2782
        %v2916 = vpop.f32.mrf.mxu0
        %v2917 = vadd.f32 %v2616, %v2916
        %v2918 = vpop.f32.mrf.mxu0
        %v2919 = vpop.f32.mrf.mxu0
        %v2920 = vadd.f32 %v2619, %v2919
        %v2921 = vpop.f32.mrf.mxu0
        %2922 = vmatprep.mubr.bf16.mxu0 0
        %2923 = vmatmul.mubr.bf16.gmra.mxu0 %v2785
        %v2924 = vpop.f32.mrf.mxu0
        %v2925 = vadd.f32 %v2624, %v2924
        %v2926 = vpop.f32.mrf.mxu0
        %v2927 = vpop.f32.mrf.mxu0
        %v2928 = vadd.f32 %v2627, %v2927
        %v2929 = vpop.f32.mrf.mxu0
        %2930 = vmatprep.mubr.bf16.mxu0 0
        %2931 = vmatmul.mubr.bf16.gmra.mxu0 %v2788
        %v2932 = vpop.f32.mrf.mxu0
        %v2933 = vadd.f32 %v2632, %v2932
        %v2934 = vpop.f32.mrf.mxu0
        %v2935 = vpop.f32.mrf.mxu0
        %v2936 = vadd.f32 %v2635, %v2935
        %v2937 = vpop.f32.mrf.mxu0
        %2938 = vmatprep.mubr.bf16.mxu0 0
        %2939 = vmatmul.mubr.bf16.gmra.mxu0 %v2791
        %v2940 = vpop.f32.mrf.mxu0
        %v2941 = vadd.f32 %v2640, %v2940
        %v2942 = vpop.f32.mrf.mxu0
        %v2943 = vpop.f32.mrf.mxu0
        %v2944 = vadd.f32 %v2643, %v2943
        %v2945 = vpop.f32.mrf.mxu0
        %2946 = vmatprep.mubr.bf16.mxu0 0
        %2947 = vmatmul.mubr.bf16.gmra.mxu0 %v2794
        %v2948 = vpop.f32.mrf.mxu0
        %v2949 = vadd.f32 %v2648, %v2948
        %v2950 = vpop.f32.mrf.mxu0
        %v2951 = vpop.f32.mrf.mxu0
        %v2952 = vadd.f32 %v2651, %v2951
        %v2953 = vpop.f32.mrf.mxu0
        %2954 = vmatprep.mubr.bf16.mxu0 0
        %2955 = vmatmul.mubr.bf16.gmra.mxu0 %v2797
        %v2956 = vpop.f32.mrf.mxu0
        %v2957 = vadd.f32 %v2656, %v2956
        %v2958 = vpop.f32.mrf.mxu0
        %v2959 = vpop.f32.mrf.mxu0
        %v2960 = vadd.f32 %v2659, %v2959
        %v2961 = vpop.f32.mrf.mxu0
        %2962 = vdwg.mxu0
        %v2963 = vadd.f32 %v2837, %v2190
        %v2964 = vadd.f32 %v2840, %v2190
        %v2965 = vadd.f32 %v2845, %v2190
        %v2966 = vadd.f32 %v2848, %v2190
        %v2967 = vadd.f32 %v2853, %v2190
        %v2968 = vadd.f32 %v2856, %v2190
        %v2969 = vadd.f32 %v2861, %v2190
        %v2970 = vadd.f32 %v2864, %v2190
        %v2971 = vadd.f32 %v2869, %v2190
        %v2972 = vadd.f32 %v2872, %v2190
        %v2973 = vadd.f32 %v2877, %v2190
        %v2974 = vadd.f32 %v2880, %v2190
        %v2975 = vadd.f32 %v2885, %v2190
        %v2976 = vadd.f32 %v2888, %v2190
        %v2977 = vadd.f32 %v2893, %v2190
        %v2978 = vadd.f32 %v2896, %v2190
        %v2979 = vadd.f32 %v2901, %v2190
        %v2980 = vadd.f32 %v2904, %v2190
        %v2981 = vadd.f32 %v2909, %v2190
        %v2982 = vadd.f32 %v2912, %v2190
        %v2983 = vadd.f32 %v2917, %v2190
        %v2984 = vadd.f32 %v2920, %v2190
        %v2985 = vadd.f32 %v2925, %v2190
        %v2986 = vadd.f32 %v2928, %v2190
        %v2987 = vadd.f32 %v2933, %v2190
        %v2988 = vadd.f32 %v2936, %v2190
        %v2989 = vadd.f32 %v2941, %v2190
        %v2990 = vadd.f32 %v2944, %v2190
        %v2991 = vadd.f32 %v2949, %v2190
        %v2992 = vadd.f32 %v2952, %v2190
        %v2993 = vadd.f32 %v2957, %v2190
        %v2994 = vadd.f32 %v2960, %v2190
        %v2995 = vmax.f32 %v2963, 0.0
        %v2996 = vmax.f32 %v2964, 0.0
        %v2997 = vmax.f32 %v2965, 0.0
        %v2998 = vmax.f32 %v2966, 0.0
        %v2999 = vmax.f32 %v2967, 0.0
        %v3000 = vmax.f32 %v2968, 0.0
        %v3001 = vmax.f32 %v2969, 0.0
        %v3002 = vmax.f32 %v2970, 0.0
        %v3003 = vmax.f32 %v2971, 0.0
        %v3004 = vmax.f32 %v2972, 0.0
        %v3005 = vmax.f32 %v2973, 0.0
        %v3006 = vmax.f32 %v2974, 0.0
        %v3007 = vmax.f32 %v2975, 0.0
        %v3008 = vmax.f32 %v2976, 0.0
        %v3009 = vmax.f32 %v2977, 0.0
        %v3010 = vmax.f32 %v2978, 0.0
        %v3011 = vmax.f32 %v2979, 0.0
        %v3012 = vmax.f32 %v2980, 0.0
        %v3013 = vmax.f32 %v2981, 0.0
        %v3014 = vmax.f32 %v2982, 0.0
        %v3015 = vmax.f32 %v2983, 0.0
        %v3016 = vmax.f32 %v2984, 0.0
        %v3017 = vmax.f32 %v2985, 0.0
        %v3018 = vmax.f32 %v2986, 0.0
        %v3019 = vmax.f32 %v2987, 0.0
        %v3020 = vmax.f32 %v2988, 0.0
        %v3021 = vmax.f32 %v2989, 0.0
        %v3022 = vmax.f32 %v2990, 0.0
        %v3023 = vmax.f32 %v2991, 0.0
        %v3024 = vmax.f32 %v2992, 0.0
        %v3025 = vmax.f32 %v2993, 0.0
        %v3026 = vmax.f32 %v2994, 0.0
        %s3027 = scalar_lea.vmem %s163, 16 [#allocation3]
        %3028 = vst.msk [vmem:[%s3027] sm:$0xff] %vm2256, %v2995
        %3029 = vst.msk [vmem:[%s3027 + $0x8] sm:$0xff] %vm2256, %v2996
        %3030 = vst.msk [vmem:[%s3027 + $0x20] sm:$0xff] %vm2256, %v2997
        %3031 = vst.msk [vmem:[%s3027 + $0x28] sm:$0xff] %vm2256, %v2998
        %3032 = vst.msk [vmem:[%s3027 + $0x40] sm:$0xff] %vm2256, %v2999
        %3033 = vst.msk [vmem:[%s3027 + $0x48] sm:$0xff] %vm2256, %v3000
        %3034 = vst.msk [vmem:[%s3027 + $0x60] sm:$0xff] %vm2256, %v3001
        %3035 = vst.msk [vmem:[%s3027 + $0x68] sm:$0xff] %vm2256, %v3002
        %3036 = vst.msk [vmem:[%s3027 + $0x80] sm:$0xff] %vm2256, %v3003
        %3037 = vst.msk [vmem:[%s3027 + $0x88] sm:$0xff] %vm2256, %v3004
        %3038 = vst.msk [vmem:[%s3027 + $0xa0] sm:$0xff] %vm2256, %v3005
        %3039 = vst.msk [vmem:[%s3027 + $0xa8] sm:$0xff] %vm2256, %v3006
        %3040 = vst.msk [vmem:[%s3027 + $0xc0] sm:$0xff] %vm2256, %v3007
        %3041 = vst.msk [vmem:[%s3027 + $0xc8] sm:$0xff] %vm2256, %v3008
        %3042 = vst.msk [vmem:[%s3027 + $0xe0] sm:$0xff] %vm2256, %v3009
        %3043 = vst.msk [vmem:[%s3027 + $0xe8] sm:$0xff] %vm2256, %v3010
        %3044 = vst.msk [vmem:[%s3027 + $0x100] sm:$0xff] %vm2256, %v3011
        %3045 = vst.msk [vmem:[%s3027 + $0x108] sm:$0xff] %vm2256, %v3012
        %3046 = vst.msk [vmem:[%s3027 + $0x120] sm:$0xff] %vm2256, %v3013
        %3047 = vst.msk [vmem:[%s3027 + $0x128] sm:$0xff] %vm2256, %v3014
        %3048 = vst.msk [vmem:[%s3027 + $0x140] sm:$0xff] %vm2256, %v3015
        %3049 = vst.msk [vmem:[%s3027 + $0x148] sm:$0xff] %vm2256, %v3016
        %3050 = vst.msk [vmem:[%s3027 + $0x160] sm:$0xff] %vm2256, %v3017
        %3051 = vst.msk [vmem:[%s3027 + $0x168] sm:$0xff] %vm2256, %v3018
        %3052 = vst.msk [vmem:[%s3027 + $0x180] sm:$0xff] %vm2256, %v3019
        %3053 = vst.msk [vmem:[%s3027 + $0x188] sm:$0xff] %vm2256, %v3020
        %3054 = vst.msk [vmem:[%s3027 + $0x1a0] sm:$0xff] %vm2256, %v3021
        %3055 = vst.msk [vmem:[%s3027 + $0x1a8] sm:$0xff] %vm2256, %v3022
        %3056 = vst.msk [vmem:[%s3027 + $0x1c0] sm:$0xff] %vm2256, %v3023
        %3057 = vst.msk [vmem:[%s3027 + $0x1c8] sm:$0xff] %vm2256, %v3024
        %3058 = vst.msk [vmem:[%s3027 + $0x1e0] sm:$0xff] %vm2256, %v3025
        %3059 = vst.msk [vmem:[%s3027 + $0x1e8] sm:$0xff] %vm2256, %v3026
        %s3060 = sand.u32 %s93, 1
        %s3061 = scalar_lea.sflag [#allocation4], %s3060
        %s3062 = sand.u32 %s93, 1
        %s3063 = smul.addr %s3062, 512
        %s3064 = scalar_lea.vmem [#allocation3], %s3063
        // Predicated region
        $region33: #{tpu_custom_call.1} parent=31 // pred_check
          %p3065 = pneg %p103
        $region34: #{tpu_custom_call.1} parent=31 // pred_check_branch
          %3067 = sbr.rel (%p3065) target = $region36
        $region35: #{tpu_custom_call.1} parent=31 // pred_region
          %s3069 = ssub.s32 8192, 8192
          %3070 = vsyncadd %s3061, %s3069
          %s3071 = smul.addr %s17, 64
          %s3072 = smul.addr %s3071, 128
          %s3073 = scalar_lea.hbm %s3, %s3072
          %s3074 = sshll.u32 %s3064, 4
          %s3075 = int_to_ptr.vmem [resolvable:$true] %s3074
          %3080 = dma.vmem_to_hbm [thread:$0]  %s3075, 8192, %s3073, %s3061, 128, 128, 8
        $region36: #{tpu_custom_call.1} parent=31 // pred_fallthru
          _
      $region32: #{tpu_custom_call.1} parent=5 // pred_fallthru
        _
      %p3081 = scmp.le.s32.totalorder 2, %s12
      // Predicated region
      $region37: #{tpu_custom_call.1} parent=5 // pred_check
        %p3082 = pneg %p3081
      $region38: #{tpu_custom_call.1} parent=5 // pred_check_branch
        %3084 = sbr.rel (%p3082) target = $region40
      $region39: #{tpu_custom_call.1} parent=5 // pred_region
        %s3085 = ssub.s32 %s12, 2
        // Predicated region
        $region41: #{tpu_custom_call.1} parent=39 // pred_check
          %p3086 = pneg %p109
        $region42: #{tpu_custom_call.1} parent=39 // pred_check_branch
          %3088 = sbr.rel (%p3086) target = $region44
        $region43: #{tpu_custom_call.1} parent=39 // pred_region
          %s3089 = sand.u32 %s94, 1
          %s3090 = scalar_lea.sflag [#allocation4], %s3089
          %s3091 = sand.u32 %s94, 1
          %s3092 = smul.addr %s3091, 512
          %s3093 = scalar_lea.vmem [#allocation3], %s3092
          %3094 = dma.done %s3090, 8192
        $region44: #{tpu_custom_call.1} parent=39 // pred_fallthru
          _
      $region40: #{tpu_custom_call.1} parent=5 // pred_fallthru
        _
    $region6: #{tpu_custom_call.1} parent=1 // loop_footer
      %s16 = sadd.s32 1, %s12
    $region7: #{tpu_custom_call.1} parent=1 // loop_footer_branch
      %11 = sbr.rel target = $region3
    $region8: #{tpu_custom_call.1} parent=1 // loop_exit
      _
    %3095 = vsyncpa [#allocation4], 1
    %s3096 = scalar_lea.sflag [#allocation4], 1
    %3097 = vsyncpa %s3096, 1

</llo_original>
